<compile_context>
chip_gen: v5e
topology: v5e:2x2
jax: 0.10.0
libtpu: 0.0.40
codegen_flags: <defaults>
</compile_context>

<pallas_src>
import functools

import jax
import jax.numpy as jnp
from jax.experimental import pallas as pl
from jax.experimental.pallas import tpu as pltpu


def _gpt_attention_kernel(
    tgt_ref, qpos_ref, prompt_ref,            # (L, Bt, D), (L, Bt, D), (2P, Bt, D)
    wqk_ref, wk_ref, wv_ref, wo_ref,          # (D, 2D), (D, D), (D, D), (D, D)
    bq_ref, bv_ref, bo_ref,                   # (1, D) each
    gamma_ref, beta_ref,                      # (1, D)
    out_ref,                                  # (L, Bt, D)
    *, nhead, mxu_dtype,
):
    L, Bt, D = tgt_ref.shape
    P = prompt_ref.shape[0] // 2
    H = nhead
    hd = D // H
    M = L * Bt
    f32 = jnp.float32

    def mx(x):                                # MXU feed dtype (f32 or bf16), f32 accum
        return x.astype(mxu_dtype)

    tgt = tgt_ref[...].astype(f32)                        # (L, Bt, D)
    qk = tgt + qpos_ref[...].astype(f32)                  # (L, Bt, D)  fused q-add
    prompt = prompt_ref[...].astype(f32)                  # (2P, Bt, D)

    qk2 = qk.reshape(M, D)
    tgt2d = tgt.reshape(M, D)
    pk2 = prompt[:P].reshape(P * Bt, D)                   # prompt K half
    pv2 = prompt[P:].reshape(P * Bt, D)                   # prompt V half

    # ---- full-width input projections (heads split AFTER the matmul) ----
    # q and the L-part of K share the same LHS -> one (M, D) x (D, 2D) MXU pass.
    qkL = jnp.dot(mx(qk2), wqk_ref[...], preferred_element_type=f32)      # (M, 2D)
    q = qkL[:, :D] + bq_ref[...]              # 1/sqrt(hd) already folded into Wq/bq
    kL = qkL[:, D:]                           # K bias dropped: softmax-invariant
    vL = jnp.dot(mx(tgt2d), wv_ref[...], preferred_element_type=f32) + bv_ref[...]
    kP = jnp.dot(mx(pk2), wk_ref[...], preferred_element_type=f32)        # (P*Bt, D)
    vP = jnp.dot(mx(pv2), wv_ref[...], preferred_element_type=f32) + bv_ref[...]

    # ---- attention batched over (batch, head): (Bt*H, T, hd) operands ----
    def to_heads(x, T):
        return x.reshape(T, Bt, H, hd).transpose(1, 2, 0, 3).reshape(Bt * H, T, hd)

    qh = to_heads(q, L)
    kLh = to_heads(kL, L)
    vLh = to_heads(vL, L)
    kPh = to_heads(kP, P)
    vPh = to_heads(vP, P)

    # two key chunks, jointly-normalized softmax (exact; avoids any seq-concat copy)
    sL = jnp.einsum("bqd,bkd->bqk", mx(qh), mx(kLh), preferred_element_type=f32)
    sP = jnp.einsum("bqd,bkd->bqk", mx(qh), mx(kPh), preferred_element_type=f32)
    m = jnp.maximum(jnp.max(sL, axis=-1, keepdims=True),
                    jnp.max(sP, axis=-1, keepdims=True))
    pLw = jnp.exp(sL - m)
    pPw = jnp.exp(sP - m)
    denom = jnp.sum(pLw, axis=-1, keepdims=True) + jnp.sum(pPw, axis=-1, keepdims=True)
    inv = pl.reciprocal(denom, approx=True)               # EUP slot

    o = (jnp.einsum("bqk,bkd->bqd", mx(pLw), mx(vLh), preferred_element_type=f32)
         + jnp.einsum("bqk,bkd->bqd", mx(pPw), mx(vPh), preferred_element_type=f32))
    o = o * inv                                           # (Bt*H, L, hd)

    # merge heads (pure reshape) and contract them inside the (D, D) out-projection
    o2 = o.reshape(Bt, H, L, hd).transpose(2, 0, 1, 3).reshape(M, D)
    tgt_attn = jnp.dot(mx(o2), wo_ref[...], preferred_element_type=f32) + bo_ref[...]

    # residual + LayerNorm in f32
    x = tgt2d + tgt_attn
    mean = jnp.mean(x, axis=-1, keepdims=True)
    xc = x - mean
    var = jnp.mean(xc * xc, axis=-1, keepdims=True)
    y = xc * jax.lax.rsqrt(var + 1e-5) * gamma_ref[...] + beta_ref[...]

    out_ref[...] = y.reshape(L, Bt, D).astype(out_ref.dtype)


def _prepare_params(params, *, nhead, mxu_dtype=jnp.float32):
    """One-time parameter rewrite: x-major (D, D) weights, [Wq|Wk] fused, scale folded."""
    D = params["wq"].shape[0]
    hd = D // nhead
    scale = 1.0 / (hd ** 0.5)

    wq = params["wq"].T * scale               # (D, D): projection is x @ W
    wk = params["wk"].T
    wv = params["wv"].T
    wo = params["wo"].T
    return dict(
        wqk=jnp.concatenate([wq, wk], axis=1).astype(mxu_dtype),     # (D, 2D)
        wk=wk.astype(mxu_dtype),
        wv=wv.astype(mxu_dtype),
        wo=wo.astype(mxu_dtype),
        bq=(params["bq"] * scale).reshape(1, D).astype(jnp.float32),
        bv=params["bv"].reshape(1, D).astype(jnp.float32),
        bo=params["bo"].reshape(1, D).astype(jnp.float32),
        gamma=params["ln_gamma"].reshape(1, D).astype(jnp.float32),
        beta=params["ln_beta"].reshape(1, D).astype(jnp.float32),
    )


def _vmem_limit_bytes(L, twoP, bt, D, nhead):
    """Rough per-step footprint -> scoped VMEM request (helps v5e's 16 MiB default)."""
    S = L + twoP // 2
    acts = 4 * 4 * (L + twoP) * bt * D                      # pipelined activation blocks
    weights = 4 * 6 * D * D
    temps = 4 * (12 * (L + twoP) * bt * D + 3 * nhead * bt * L * S)
    est = acts + weights + temps
    return int(min(64 * 2 ** 20, max(32 * 2 ** 20, 2 * est)))


def gpt_attention_layer(tgt, prompt, query_pos, params, *, nhead,
                        batch_tile=None, mxu_dtype=jnp.float32):
    """tgt: (L, B, D), prompt: (2P, B, D), query_pos: (L, B, D)  ->  (L, B, D)"""
    L, B, D = tgt.shape
    twoP = prompt.shape[0]
    assert D % nhead == 0, "d_model must be divisible by nhead"

    # Batch-tile selection in the ORIGINAL (L, B, D) layout (no wrapper transposes).
    # Axis-1 block must be a multiple of 8 (sublane rule) or the whole batch.
    if batch_tile is None:
        bt = B
        if B % 16 == 0:
            bt = B // 2                     # >= 2 parallel grid steps (v7x megacore)
            while bt % 16 == 0 and (L + twoP) * bt * D * 4 > 16 * 2 ** 20:
                bt //= 2                    # keep the per-step working set moderate
    else:
        bt = batch_tile
    assert B % bt == 0 and (bt == B or bt % 8 == 0), \
        "batch_tile must divide B and be a multiple of 8 (or equal B)"

    kp = _prepare_params(params, nhead=nhead, mxu_dtype=mxu_dtype)

    act_L = pl.BlockSpec((L, bt, D), lambda b: (0, b, 0))
    act_P = pl.BlockSpec((twoP, bt, D), lambda b: (0, b, 0))
    w_qk = pl.BlockSpec((D, 2 * D), lambda b: (0, 0))
    w_dd = pl.BlockSpec((D, D), lambda b: (0, 0))
    vec = pl.BlockSpec((1, D), lambda b: (0, 0))

    kernel = functools.partial(_gpt_attention_kernel, nhead=nhead, mxu_dtype=mxu_dtype)

    out = pl.pallas_call(
        kernel,
        out_shape=jax.ShapeDtypeStruct((L, B, D), tgt.dtype),
        grid=(B // bt,),
        in_specs=[
            act_L, act_L, act_P,
            w_qk, w_dd, w_dd, w_dd,
            vec, vec, vec, vec, vec,
        ],
        out_specs=pl.BlockSpec((L, bt, D), lambda b: (0, b, 0)),
        compiler_params=pltpu.CompilerParams(
            dimension_semantics=("parallel",),
            vmem_limit_bytes=_vmem_limit_bytes(L, twoP, bt, D, nhead),
        ),
    )(tgt, query_pos, prompt,
      kp["wqk"], kp["wk"], kp["wv"], kp["wo"],
      kp["bq"], kp["bv"], kp["bo"], kp["gamma"], kp["beta"])
    return out


# ---------------- pure-JAX reference (mirrors nn.MultiheadAttention + LayerNorm) ----------------
def reference(tgt, prompt, query_pos, params, *, nhead):
    L, B, D = tgt.shape
    P = prompt.shape[0] // 2
    head_dim = D // nhead
    qk = tgt + query_pos
    k_full = jnp.concatenate([qk, prompt[:P]], axis=0)
    v_full = jnp.concatenate([tgt, prompt[P:]], axis=0)

    def proj(x, w, b):  # x: (T, B, D), torch Linear: x @ w.T + b
        return jnp.einsum("tbd,ed->tbe", x, w) + b

    q = proj(qk, params["wq"], params["bq"])
    k = proj(k_full, params["wk"], params["bk"])
    v = proj(v_full, params["wv"], params["bv"])

    def heads(x):  # (T, B, D) -> (B, H, T, hd)
        T = x.shape[0]
        return jnp.transpose(x.reshape(T, B, nhead, head_dim), (1, 2, 0, 3))

    qh, kh, vh = heads(q), heads(k), heads(v)
    scores = jnp.einsum("bhqd,bhkd->bhqk", qh, kh) / (head_dim ** 0.5)
    attn = jax.nn.softmax(scores, axis=-1)
    o = jnp.einsum("bhqk,bhkd->bhqd", attn, vh)                     # (B, H, L, hd)
    o = jnp.transpose(o, (2, 0, 1, 3)).reshape(L, B, D)
    tgt2 = jnp.einsum("tbd,ed->tbe", o, params["wo"]) + params["bo"]
    x = tgt + tgt2
    mean = jnp.mean(x, axis=-1, keepdims=True)
    var = jnp.mean((x - mean) ** 2, axis=-1, keepdims=True)
    xhat = (x - mean) / jnp.sqrt(var + 1e-5)
    return xhat * params["ln_gamma"] + params["ln_beta"]


def _xavier(key, shape):
    fan_in, fan_out = shape[1], shape[0]
    limit = (6.0 / (fan_in + fan_out)) ** 0.5
    return jax.random.uniform(key, shape, jnp.float32, -limit, limit)


if __name__ == "__main__":
    # small shapes consistent with the module
    d_model, nhead = 32, 4
    L, B, P = 8, 2, 4          # queries, batch, prompt-half length

    key = jax.random.PRNGKey(0)
    ks = jax.random.split(key, 13)

    tgt = jax.random.normal(ks[0], (L, B, d_model), jnp.float32)
    prompt = jax.random.normal(ks[1], (2 * P, B, d_model), jnp.float32)
    query_pos = jax.random.normal(ks[2], (L, B, d_model), jnp.float32)

    params = {
        "wq": _xavier(ks[3], (d_model, d_model)),
        "wk": _xavier(ks[4], (d_model, d_model)),
        "wv": _xavier(ks[5], (d_model, d_model)),
        "wo": _xavier(ks[6], (d_model, d_model)),
        "bq": 0.1 * jax.random.normal(ks[7], (d_model,), jnp.float32),
        "bk": 0.1 * jax.random.normal(ks[8], (d_model,), jnp.float32),
        "bv": 0.1 * jax.random.normal(ks[9], (d_model,), jnp.float32),
        "bo": 0.1 * jax.random.normal(ks[10], (d_model,), jnp.float32),
        "ln_gamma": 1.0 + 0.1 * jax.random.normal(ks[11], (d_model,), jnp.float32),
        "ln_beta": 0.1 * jax.random.normal(ks[12], (d_model,), jnp.float32),
    }

    ref = reference(tgt, prompt, query_pos, params, nhead=nhead)

    # f32 MXU-feed path: tight correctness check (tolerance covers approx reciprocal)
    out = gpt_attention_layer(tgt, prompt, query_pos, params, nhead=nhead)
    out = jax.block_until_ready(out)
    assert out.shape == (L, B, d_model)
    max_err = float(jnp.max(jnp.abs(out - ref)))
    assert jnp.allclose(out, ref, atol=5e-3, rtol=5e-3), max_err

    # bf16 MXU-feed path (recommended on v5e/v6e/v7x); f32 accumulation & softmax
    out_bf16 = gpt_attention_layer(tgt, prompt, query_pos, params, nhead=nhead,
                                   mxu_dtype=jnp.bfloat16)
    out_bf16 = jax.block_until_ready(out_bf16)
    max_err_bf16 = float(jnp.max(jnp.abs(out_bf16 - ref)))
    assert max_err_bf16 < 0.2, max_err_bf16

    print("KERNEL_OK")
</pallas_src>

<mosaic_0001>
module attributes {stable_mosaic.version = 11 : i64} {
  func.func @_gpt_attention_kernel(%arg0: i32, %arg1: memref<8x2x32xf32, #tpu.memory_space<vmem>>, %arg2: memref<8x2x32xf32, #tpu.memory_space<vmem>>, %arg3: memref<8x2x32xf32, #tpu.memory_space<vmem>>, %arg4: memref<32x64xf32, #tpu.memory_space<vmem>>, %arg5: memref<32x32xf32, #tpu.memory_space<vmem>>, %arg6: memref<32x32xf32, #tpu.memory_space<vmem>>, %arg7: memref<32x32xf32, #tpu.memory_space<vmem>>, %arg8: memref<1x32xf32, #tpu.memory_space<vmem>>, %arg9: memref<1x32xf32, #tpu.memory_space<vmem>>, %arg10: memref<1x32xf32, #tpu.memory_space<vmem>>, %arg11: memref<1x32xf32, #tpu.memory_space<vmem>>, %arg12: memref<1x32xf32, #tpu.memory_space<vmem>>, %arg13: memref<8x2x32xf32, #tpu.memory_space<vmem>>) attributes {dimension_semantics = [#tpu.dimension_semantics<parallel>], iteration_bounds = array<i64: 1>, scalar_prefetch = 0 : i64, scratch_operands = 0 : i64, tpu.core_type = #tpu.core_type<tc>, window_params = [{transform_indices = @transform_0, window_bounds = array<i64: 8, 2, 32>}, {transform_indices = @transform_1, window_bounds = array<i64: 8, 2, 32>}, {transform_indices = @transform_2, window_bounds = array<i64: 8, 2, 32>}, {pipeline_mode = #tpu.pipeline_mode<synchronous>, transform_indices = @transform_3, window_bounds = array<i64: 32, 64>}, {pipeline_mode = #tpu.pipeline_mode<synchronous>, transform_indices = @transform_4, window_bounds = array<i64: 32, 32>}, {pipeline_mode = #tpu.pipeline_mode<synchronous>, transform_indices = @transform_5, window_bounds = array<i64: 32, 32>}, {pipeline_mode = #tpu.pipeline_mode<synchronous>, transform_indices = @transform_6, window_bounds = array<i64: 32, 32>}, {pipeline_mode = #tpu.pipeline_mode<synchronous>, transform_indices = @transform_7, window_bounds = array<i64: 1, 32>}, {pipeline_mode = #tpu.pipeline_mode<synchronous>, transform_indices = @transform_8, window_bounds = array<i64: 1, 32>}, {pipeline_mode = #tpu.pipeline_mode<synchronous>, transform_indices = @transform_9, window_bounds = array<i64: 1, 32>}, {pipeline_mode = #tpu.pipeline_mode<synchronous>, transform_indices = @transform_10, window_bounds = array<i64: 1, 32>}, {pipeline_mode = #tpu.pipeline_mode<synchronous>, transform_indices = @transform_11, window_bounds = array<i64: 1, 32>}, {transform_indices = @transform_12, window_bounds = array<i64: 8, 2, 32>}]} {
    %c0 = arith.constant 0 : index
    %c0_0 = arith.constant 0 : index
    %c0_1 = arith.constant 0 : index
    %0 = vector.load %arg1[%c0, %c0_0, %c0_1] : memref<8x2x32xf32, #tpu.memory_space<vmem>>, vector<8x2x32xf32>
    %c0_2 = arith.constant 0 : index
    %c0_3 = arith.constant 0 : index
    %c0_4 = arith.constant 0 : index
    %1 = vector.load %arg2[%c0_2, %c0_3, %c0_4] : memref<8x2x32xf32, #tpu.memory_space<vmem>>, vector<8x2x32xf32>
    %2 = arith.addf %0, %1 : vector<8x2x32xf32>
    %c0_5 = arith.constant 0 : index
    %c0_6 = arith.constant 0 : index
    %c0_7 = arith.constant 0 : index
    %3 = vector.load %arg3[%c0_5, %c0_6, %c0_7] : memref<8x2x32xf32, #tpu.memory_space<vmem>>, vector<8x2x32xf32>
    %4 = vector.shape_cast %2 : vector<8x2x32xf32> to vector<16x32xf32>
    %5 = vector.shape_cast %0 : vector<8x2x32xf32> to vector<16x32xf32>
    %6 = vector.extract_strided_slice %3 {offsets = [0, 0, 0], sizes = [4, 2, 32], strides = [1, 1, 1]} : vector<8x2x32xf32> to vector<4x2x32xf32>
    %7 = vector.shape_cast %6 : vector<4x2x32xf32> to vector<8x32xf32>
    %8 = vector.extract_strided_slice %3 {offsets = [4, 0, 0], sizes = [4, 2, 32], strides = [1, 1, 1]} : vector<8x2x32xf32> to vector<4x2x32xf32>
    %9 = vector.shape_cast %8 : vector<4x2x32xf32> to vector<8x32xf32>
    %c0_8 = arith.constant 0 : index
    %c0_9 = arith.constant 0 : index
    %10 = vector.load %arg4[%c0_8, %c0_9] : memref<32x64xf32, #tpu.memory_space<vmem>>, vector<32x64xf32>
    %cst = arith.constant dense<0.000000e+00> : vector<16x64xf32>
    %11 = tpu.matmul %4, %10, %cst {dimension_numbers = #tpu.dot_dimension_numbers<[1], [0], [0], [1], [0, 0, 1, 1], [], []>} : vector<16x32xf32>, vector<32x64xf32>, vector<16x64xf32> -> vector<16x64xf32>
    %12 = vector.extract_strided_slice %11 {offsets = [0, 0], sizes = [16, 32], strides = [1, 1]} : vector<16x64xf32> to vector<16x32xf32>
    %c0_10 = arith.constant 0 : index
    %c0_11 = arith.constant 0 : index
    %13 = vector.load %arg8[%c0_10, %c0_11] : memref<1x32xf32, #tpu.memory_space<vmem>>, vector<1x32xf32>
    %14 = vector.broadcast %13 : vector<1x32xf32> to vector<16x32xf32>
    %15 = arith.addf %12, %14 : vector<16x32xf32>
    %16 = vector.extract_strided_slice %11 {offsets = [0, 32], sizes = [16, 32], strides = [1, 1]} : vector<16x64xf32> to vector<16x32xf32>
    %c0_12 = arith.constant 0 : index
    %c0_13 = arith.constant 0 : index
    %17 = vector.load %arg6[%c0_12, %c0_13] : memref<32x32xf32, #tpu.memory_space<vmem>>, vector<32x32xf32>
    %cst_14 = arith.constant dense<0.000000e+00> : vector<16x32xf32>
    %18 = tpu.matmul %5, %17, %cst_14 {dimension_numbers = #tpu.dot_dimension_numbers<[1], [0], [0], [1], [0, 0, 1, 1], [], []>} : vector<16x32xf32>, vector<32x32xf32>, vector<16x32xf32> -> vector<16x32xf32>
    %c0_15 = arith.constant 0 : index
    %c0_16 = arith.constant 0 : index
    %19 = vector.load %arg9[%c0_15, %c0_16] : memref<1x32xf32, #tpu.memory_space<vmem>>, vector<1x32xf32>
    %20 = vector.broadcast %19 : vector<1x32xf32> to vector<16x32xf32>
    %21 = arith.addf %18, %20 : vector<16x32xf32>
    %c0_17 = arith.constant 0 : index
    %c0_18 = arith.constant 0 : index
    %22 = vector.load %arg5[%c0_17, %c0_18] : memref<32x32xf32, #tpu.memory_space<vmem>>, vector<32x32xf32>
    %cst_19 = arith.constant dense<0.000000e+00> : vector<8x32xf32>
    %23 = tpu.matmul %7, %22, %cst_19 {dimension_numbers = #tpu.dot_dimension_numbers<[1], [0], [0], [1], [0, 0, 1, 1], [], []>} : vector<8x32xf32>, vector<32x32xf32>, vector<8x32xf32> -> vector<8x32xf32>
    %c0_20 = arith.constant 0 : index
    %c0_21 = arith.constant 0 : index
    %24 = vector.load %arg6[%c0_20, %c0_21] : memref<32x32xf32, #tpu.memory_space<vmem>>, vector<32x32xf32>
    %cst_22 = arith.constant dense<0.000000e+00> : vector<8x32xf32>
    %25 = tpu.matmul %9, %24, %cst_22 {dimension_numbers = #tpu.dot_dimension_numbers<[1], [0], [0], [1], [0, 0, 1, 1], [], []>} : vector<8x32xf32>, vector<32x32xf32>, vector<8x32xf32> -> vector<8x32xf32>
    %c0_23 = arith.constant 0 : index
    %c0_24 = arith.constant 0 : index
    %26 = vector.load %arg9[%c0_23, %c0_24] : memref<1x32xf32, #tpu.memory_space<vmem>>, vector<1x32xf32>
    %27 = vector.broadcast %26 : vector<1x32xf32> to vector<8x32xf32>
    %28 = arith.addf %25, %27 : vector<8x32xf32>
    %29 = vector.shape_cast %15 : vector<16x32xf32> to vector<8x2x4x8xf32>
    %30 = tpu.transpose %29, [1, 2, 0, 3] : vector<8x2x4x8xf32> -> vector<2x4x8x8xf32>
    %31 = vector.shape_cast %30 : vector<2x4x8x8xf32> to vector<8x8x8xf32>
    %32 = vector.shape_cast %16 : vector<16x32xf32> to vector<8x2x4x8xf32>
    %33 = tpu.transpose %32, [1, 2, 0, 3] : vector<8x2x4x8xf32> -> vector<2x4x8x8xf32>
    %34 = vector.shape_cast %33 : vector<2x4x8x8xf32> to vector<8x8x8xf32>
    %35 = vector.shape_cast %21 : vector<16x32xf32> to vector<8x2x4x8xf32>
    %36 = tpu.transpose %35, [1, 2, 0, 3] : vector<8x2x4x8xf32> -> vector<2x4x8x8xf32>
    %37 = vector.shape_cast %36 : vector<2x4x8x8xf32> to vector<8x8x8xf32>
    %38 = vector.shape_cast %23 : vector<8x32xf32> to vector<4x2x4x8xf32>
    %39 = tpu.transpose %38, [1, 2, 0, 3] : vector<4x2x4x8xf32> -> vector<2x4x4x8xf32>
    %40 = vector.shape_cast %39 : vector<2x4x4x8xf32> to vector<8x4x8xf32>
    %41 = vector.shape_cast %28 : vector<8x32xf32> to vector<4x2x4x8xf32>
    %42 = tpu.transpose %41, [1, 2, 0, 3] : vector<4x2x4x8xf32> -> vector<2x4x4x8xf32>
    %43 = vector.shape_cast %42 : vector<2x4x4x8xf32> to vector<8x4x8xf32>
    "tpu.trace_start"() <{level = 10 : i32, message = "bqd,bkd->bqk"}> : () -> ()
    %cst_25 = arith.constant dense<0.000000e+00> : vector<8x8x8xf32>
    %44 = tpu.matmul %31, %34, %cst_25 {dimension_numbers = #tpu.dot_dimension_numbers<[2], [2], [1], [1], [0, 0, 0, 1, 1, 1], [0], [0]>} : vector<8x8x8xf32>, vector<8x8x8xf32>, vector<8x8x8xf32> -> vector<8x8x8xf32>
    %cst_26 = arith.constant dense<0.000000e+00> : vector<8x8x4xf32>
    %45 = tpu.matmul %31, %40, %cst_26 {dimension_numbers = #tpu.dot_dimension_numbers<[2], [2], [1], [1], [0, 0, 0, 1, 1, 1], [0], [0]>} : vector<8x8x8xf32>, vector<8x4x8xf32>, vector<8x8x4xf32> -> vector<8x8x4xf32>
    "tpu.trace_stop"() : () -> ()
    %cst_27 = arith.constant dense<0xFF800000> : vector<8x8xf32>
    %46 = vector.multi_reduction <maximumf>, %44, %cst_27 [2] : vector<8x8x8xf32> to vector<8x8xf32>
    %47 = vector.shape_cast %46 : vector<8x8xf32> to vector<8x8x1xf32>
    %cst_28 = arith.constant dense<0xFF800000> : vector<8x8xf32>
    %48 = vector.multi_reduction <maximumf>, %45, %cst_28 [2] : vector<8x8x4xf32> to vector<8x8xf32>
    %49 = vector.shape_cast %48 : vector<8x8xf32> to vector<8x8x1xf32>
    %50 = arith.maximumf %47, %49 : vector<8x8x1xf32>
    %51 = vector.broadcast %50 : vector<8x8x1xf32> to vector<8x8x8xf32>
    %52 = arith.subf %44, %51 : vector<8x8x8xf32>
    %53 = math.exp %52 : vector<8x8x8xf32>
    %54 = vector.broadcast %50 : vector<8x8x1xf32> to vector<8x8x4xf32>
    %55 = arith.subf %45, %54 : vector<8x8x4xf32>
    %56 = math.exp %55 : vector<8x8x4xf32>
    %cst_29 = arith.constant dense<0.000000e+00> : vector<8x8xf32>
    %57 = vector.multi_reduction <add>, %53, %cst_29 [2] : vector<8x8x8xf32> to vector<8x8xf32>
    %58 = vector.shape_cast %57 : vector<8x8xf32> to vector<8x8x1xf32>
    %cst_30 = arith.constant dense<0.000000e+00> : vector<8x8xf32>
    %59 = vector.multi_reduction <add>, %56, %cst_30 [2] : vector<8x8x4xf32> to vector<8x8xf32>
    %60 = vector.shape_cast %59 : vector<8x8xf32> to vector<8x8x1xf32>
    %61 = arith.addf %58, %60 : vector<8x8x1xf32>
    %62 = tpu.reciprocal %61 {approx = true} : vector<8x8x1xf32> -> vector<8x8x1xf32>
    "tpu.trace_start"() <{level = 10 : i32, message = "bqk,bkd->bqd"}> : () -> ()
    %cst_31 = arith.constant dense<0.000000e+00> : vector<8x8x8xf32>
    %63 = tpu.matmul %53, %37, %cst_31 {dimension_numbers = #tpu.dot_dimension_numbers<[2], [1], [1], [2], [0, 0, 0, 1, 1, 2], [0], [0]>} : vector<8x8x8xf32>, vector<8x8x8xf32>, vector<8x8x8xf32> -> vector<8x8x8xf32>
    %cst_32 = arith.constant dense<0.000000e+00> : vector<8x8x8xf32>
    %64 = tpu.matmul %56, %43, %cst_32 {dimension_numbers = #tpu.dot_dimension_numbers<[2], [1], [1], [2], [0, 0, 0, 1, 1, 2], [0], [0]>} : vector<8x8x4xf32>, vector<8x4x8xf32>, vector<8x8x8xf32> -> vector<8x8x8xf32>
    "tpu.trace_stop"() : () -> ()
    %65 = arith.addf %63, %64 : vector<8x8x8xf32>
    %66 = vector.broadcast %62 : vector<8x8x1xf32> to vector<8x8x8xf32>
    %67 = arith.mulf %65, %66 : vector<8x8x8xf32>
    %68 = vector.shape_cast %67 : vector<8x8x8xf32> to vector<2x4x8x8xf32>
    %69 = tpu.transpose %68, [2, 0, 1, 3] : vector<2x4x8x8xf32> -> vector<8x2x4x8xf32>
    %70 = vector.shape_cast %69 : vector<8x2x4x8xf32> to vector<16x32xf32>
    %c0_33 = arith.constant 0 : index
    %c0_34 = arith.constant 0 : index
    %71 = vector.load %arg7[%c0_33, %c0_34] : memref<32x32xf32, #tpu.memory_space<vmem>>, vector<32x32xf32>
    %cst_35 = arith.constant dense<0.000000e+00> : vector<16x32xf32>
    %72 = tpu.matmul %70, %71, %cst_35 {dimension_numbers = #tpu.dot_dimension_numbers<[1], [0], [0], [1], [0, 0, 1, 1], [], []>} : vector<16x32xf32>, vector<32x32xf32>, vector<16x32xf32> -> vector<16x32xf32>
    %c0_36 = arith.constant 0 : index
    %c0_37 = arith.constant 0 : index
    %73 = vector.load %arg10[%c0_36, %c0_37] : memref<1x32xf32, #tpu.memory_space<vmem>>, vector<1x32xf32>
    %74 = vector.broadcast %73 : vector<1x32xf32> to vector<16x32xf32>
    %75 = arith.addf %72, %74 : vector<16x32xf32>
    %76 = arith.addf %5, %75 : vector<16x32xf32>
    %cst_38 = arith.constant dense<0.000000e+00> : vector<16xf32>
    %77 = vector.multi_reduction <add>, %76, %cst_38 [1] : vector<16x32xf32> to vector<16xf32>
    %78 = vector.shape_cast %77 : vector<16xf32> to vector<16x1xf32>
    %cst_39 = arith.constant 3.200000e+01 : f32
    %79 = vector.broadcast %cst_39 : f32 to vector<16x1xf32>
    %80 = arith.divf %78, %79 : vector<16x1xf32>
    %81 = vector.broadcast %80 : vector<16x1xf32> to vector<16x32xf32>
    %82 = arith.subf %76, %81 : vector<16x32xf32>
    %83 = arith.mulf %82, %82 : vector<16x32xf32>
    %cst_40 = arith.constant dense<0.000000e+00> : vector<16xf32>
    %84 = vector.multi_reduction <add>, %83, %cst_40 [1] : vector<16x32xf32> to vector<16xf32>
    %85 = vector.shape_cast %84 : vector<16xf32> to vector<16x1xf32>
    %cst_41 = arith.constant 3.200000e+01 : f32
    %86 = vector.broadcast %cst_41 : f32 to vector<16x1xf32>
    %87 = arith.divf %85, %86 : vector<16x1xf32>
    %cst_42 = arith.constant 9.99999974E-6 : f32
    %88 = vector.broadcast %cst_42 : f32 to vector<16x1xf32>
    %89 = arith.addf %87, %88 : vector<16x1xf32>
    %90 = math.rsqrt %89 : vector<16x1xf32>
    %91 = vector.broadcast %90 : vector<16x1xf32> to vector<16x32xf32>
    %92 = arith.mulf %82, %91 : vector<16x32xf32>
    %c0_43 = arith.constant 0 : index
    %c0_44 = arith.constant 0 : index
    %93 = vector.load %arg11[%c0_43, %c0_44] : memref<1x32xf32, #tpu.memory_space<vmem>>, vector<1x32xf32>
    %94 = vector.broadcast %93 : vector<1x32xf32> to vector<16x32xf32>
    %95 = arith.mulf %92, %94 : vector<16x32xf32>
    %c0_45 = arith.constant 0 : index
    %c0_46 = arith.constant 0 : index
    %96 = vector.load %arg12[%c0_45, %c0_46] : memref<1x32xf32, #tpu.memory_space<vmem>>, vector<1x32xf32>
    %97 = vector.broadcast %96 : vector<1x32xf32> to vector<16x32xf32>
    %98 = arith.addf %95, %97 : vector<16x32xf32>
    %99 = vector.shape_cast %98 : vector<16x32xf32> to vector<8x2x32xf32>
    %c0_47 = arith.constant 0 : index
    %c0_48 = arith.constant 0 : index
    %c0_49 = arith.constant 0 : index
    %100 = vector.load %arg13[%c0_47, %c0_48, %c0_49] : memref<8x2x32xf32, #tpu.memory_space<vmem>>, vector<8x2x32xf32>
    tpu.vector_store %arg13[%c0_47, %c0_48, %c0_49], %99 {strides = array<i32>} : memref<8x2x32xf32, #tpu.memory_space<vmem>>, vector<8x2x32xf32>,
    return
  }
  func.func @transform_0(%arg0: i32) -> (i32, i32, i32) {
    %c0_i32 = arith.constant 0 : i32
    %c0_i32_0 = arith.constant 0 : i32
    %c0_i32_1 = arith.constant 0 : i32
    return %c0_i32, %arg0, %c0_i32_0 : i32, i32, i32
  }
  func.func @transform_1(%arg0: i32) -> (i32, i32, i32) {
    %c0_i32 = arith.constant 0 : i32
    %c0_i32_0 = arith.constant 0 : i32
    %c0_i32_1 = arith.constant 0 : i32
    return %c0_i32, %arg0, %c0_i32_0 : i32, i32, i32
  }
  func.func @transform_2(%arg0: i32) -> (i32, i32, i32) {
    %c0_i32 = arith.constant 0 : i32
    %c0_i32_0 = arith.constant 0 : i32
    %c0_i32_1 = arith.constant 0 : i32
    return %c0_i32, %arg0, %c0_i32_0 : i32, i32, i32
  }
  func.func @transform_3(%arg0: i32) -> (i32, i32) {
    %c0_i32 = arith.constant 0 : i32
    %c0_i32_0 = arith.constant 0 : i32
    %c0_i32_1 = arith.constant 0 : i32
    return %c0_i32, %c0_i32_0 : i32, i32
  }
  func.func @transform_4(%arg0: i32) -> (i32, i32) {
    %c0_i32 = arith.constant 0 : i32
    %c0_i32_0 = arith.constant 0 : i32
    %c0_i32_1 = arith.constant 0 : i32
    return %c0_i32, %c0_i32_0 : i32, i32
  }
  func.func @transform_5(%arg0: i32) -> (i32, i32) {
    %c0_i32 = arith.constant 0 : i32
    %c0_i32_0 = arith.constant 0 : i32
    %c0_i32_1 = arith.constant 0 : i32
    return %c0_i32, %c0_i32_0 : i32, i32
  }
  func.func @transform_6(%arg0: i32) -> (i32, i32) {
    %c0_i32 = arith.constant 0 : i32
    %c0_i32_0 = arith.constant 0 : i32
    %c0_i32_1 = arith.constant 0 : i32
    return %c0_i32, %c0_i32_0 : i32, i32
  }
  func.func @transform_7(%arg0: i32) -> (i32, i32) {
    %c0_i32 = arith.constant 0 : i32
    %c0_i32_0 = arith.constant 0 : i32
    %c0_i32_1 = arith.constant 0 : i32
    return %c0_i32, %c0_i32_0 : i32, i32
  }
  func.func @transform_8(%arg0: i32) -> (i32, i32) {
    %c0_i32 = arith.constant 0 : i32
    %c0_i32_0 = arith.constant 0 : i32
    %c0_i32_1 = arith.constant 0 : i32
    return %c0_i32, %c0_i32_0 : i32, i32
  }
  func.func @transform_9(%arg0: i32) -> (i32, i32) {
    %c0_i32 = arith.constant 0 : i32
    %c0_i32_0 = arith.constant 0 : i32
    %c0_i32_1 = arith.constant 0 : i32
    return %c0_i32, %c0_i32_0 : i32, i32
  }
  func.func @transform_10(%arg0: i32) -> (i32, i32) {
    %c0_i32 = arith.constant 0 : i32
    %c0_i32_0 = arith.constant 0 : i32
    %c0_i32_1 = arith.constant 0 : i32
    return %c0_i32, %c0_i32_0 : i32, i32
  }
  func.func @transform_11(%arg0: i32) -> (i32, i32) {
    %c0_i32 = arith.constant 0 : i32
    %c0_i32_0 = arith.constant 0 : i32
    %c0_i32_1 = arith.constant 0 : i32
    return %c0_i32, %c0_i32_0 : i32, i32
  }
  func.func @transform_12(%arg0: i32) -> (i32, i32, i32) {
    %c0_i32 = arith.constant 0 : i32
    %c0_i32_0 = arith.constant 0 : i32
    %c0_i32_1 = arith.constant 0 : i32
    return %c0_i32, %arg0, %c0_i32_0 : i32, i32, i32
  }
}

</mosaic_0001>

<llo_original>
// kernel: tpu_custom_call.1
$region0: #{tpu_custom_call.1}
  #allocation0 [shape = 'u32[]', space=smem, size = 0x4, offset = 0x4, fixed_abs, tag = 'smem constant byte address 0x4 - core index']
  #allocation1 [shape = 'u32[72,128]{1,0:T(1,128)}', space=vmem, size = 0x9000, scoped, tag = 'internal scratch']
  %s0 = inlined_call_operand.hbm [shape: f32[8,2,32], index: 0, kind: input, shape index: {}]
  %s1 = inlined_call_operand.hbm [shape: f32[8,2,32], index: 1, kind: input, shape index: {}]
  %s2 = inlined_call_operand.hbm [shape: f32[8,2,32], index: 2, kind: input, shape index: {}]
  %s3 = inlined_call_operand.hbm [shape: f32[32,64], index: 3, kind: input, shape index: {}]
  %s4 = inlined_call_operand.hbm [shape: f32[32,32], index: 4, kind: input, shape index: {}]
  %s5 = inlined_call_operand.hbm [shape: f32[32,32], index: 5, kind: input, shape index: {}]
  %s6 = inlined_call_operand.hbm [shape: f32[32,32], index: 6, kind: input, shape index: {}]
  %s7 = inlined_call_operand.vmem [shape: f32[1,32], index: 7, kind: input, shape index: {}]
  %s8 = inlined_call_operand.vmem [shape: f32[1,32], index: 8, kind: input, shape index: {}]
  %s9 = inlined_call_operand.vmem [shape: f32[1,32], index: 9, kind: input, shape index: {}]
  %s10 = inlined_call_operand.vmem [shape: f32[1,32], index: 10, kind: input, shape index: {}]
  %s11 = inlined_call_operand.vmem [shape: f32[1,32], index: 11, kind: input, shape index: {}]
  %s12 = inlined_call_operand.hbm [shape: f32[8,2,32], index: 12, kind: output, shape index: {}]
  %s13 = sld [smem:[#allocation0]]
  $region86: #{tpu_custom_call.1} parent=0
    _
  %s15 = ssub.s32 1, %s13
  %s16 = scalar_select 0, %s15, %s13
  $region1: #{tpu_custom_call.1} parent=0
    #allocation2 [shape = 'u8[8192]{0}', space=vmem, size = 0x2000, scoped, tag = 'input window, operand 0, single buffered']
    #allocation3 [shape = 's32[1]{0}', space=sflag, size = 0x4, scoped, tag = 'scoped memory for tpu_custom_call.1']
    #allocation4 [shape = 's32[1]{0}', space=sflag, size = 0x4, scoped, tag = 'scoped memory for tpu_custom_call.1']
    #allocation5 [shape = 'u8[8192]{0}', space=vmem, size = 0x2000, scoped, tag = 'input window, operand 1, single buffered']
    #allocation6 [shape = 's32[1]{0}', space=sflag, size = 0x4, scoped, tag = 'scoped memory for tpu_custom_call.1']
    #allocation7 [shape = 'u8[8192]{0}', space=vmem, size = 0x2000, scoped, tag = 'input window, operand 2, single buffered']
    #allocation8 [shape = 'u8[16384]{0}', space=vmem, size = 0x4000, scoped, tag = 'input window, operand 3, single buffered']
    #allocation9 [shape = 's32[1]{0}', space=sflag, size = 0x4, scoped, tag = 'scoped memory for tpu_custom_call.1']
    #allocation10 [shape = 'u8[16384]{0}', space=vmem, size = 0x4000, scoped, tag = 'input window, operand 4, single buffered']
    #allocation11 [shape = 'u8[16384]{0}', space=vmem, size = 0x4000, scoped, tag = 'input window, operand 5, single buffered']
    #allocation12 [shape = 's32[1]{0}', space=sflag, size = 0x4, scoped, tag = 'scoped memory for tpu_custom_call.1']
    #allocation13 [shape = 'u8[16384]{0}', space=vmem, size = 0x4000, scoped, tag = 'input window, operand 6, single buffered']
    #allocation14 [shape = 'u8[8192]{0}', space=vmem, size = 0x2000, scoped, tag = 'output window, operand 0, single buffered']
    %17 = vsyncpa [#allocation3], 0
    %18 = vsyncpa [#allocation6], 0
    %19 = vsyncpa [#allocation9], 0
    %20 = vsyncpa [#allocation12], 0
    %21 = vsyncpa [#allocation4], 0
    // Predicated region
    $region2: #{tpu_custom_call.1} parent=1 // pred_check
      _
    $region3: #{tpu_custom_call.1} parent=1 // pred_check_branch
      %23 = sbr.rel (0) target = $region5
    $region4: #{tpu_custom_call.1} parent=1 // pred_region
      %25 = vsyncadd [#allocation3], 0
      %s26 = sshll.u32 %s0, 4
      %s27 = int_to_ptr.hbm [resolvable:$true] %s26
      %s28 = sshll.u32 [#allocation2], 4
      %s29 = int_to_ptr.vmem [resolvable:$true] %s28
      %34 = dma.hbm_to_vmem [thread:$0]  %s27, 256, %s29, [#allocation3], 32, 32, 2
    $region5: #{tpu_custom_call.1} parent=1 // pred_fallthru
      _
    // Predicated region
    $region6: #{tpu_custom_call.1} parent=1 // pred_check
      _
    $region7: #{tpu_custom_call.1} parent=1 // pred_check_branch
      %36 = sbr.rel (0) target = $region9
    $region8: #{tpu_custom_call.1} parent=1 // pred_region
      %38 = vsyncadd [#allocation6], 0
      %s39 = sshll.u32 %s1, 4
      %s40 = int_to_ptr.hbm [resolvable:$true] %s39
      %s41 = sshll.u32 [#allocation5], 4
      %s42 = int_to_ptr.vmem [resolvable:$true] %s41
      %47 = dma.hbm_to_vmem [thread:$0]  %s40, 256, %s42, [#allocation6], 32, 32, 2
    $region9: #{tpu_custom_call.1} parent=1 // pred_fallthru
      _
    // Predicated region
    $region10: #{tpu_custom_call.1} parent=1 // pred_check
      _
    $region11: #{tpu_custom_call.1} parent=1 // pred_check_branch
      %49 = sbr.rel (0) target = $region13
    $region12: #{tpu_custom_call.1} parent=1 // pred_region
      %51 = vsyncadd [#allocation6], 0
      %s52 = sshll.u32 %s2, 4
      %s53 = int_to_ptr.hbm [resolvable:$true] %s52
      %s54 = sshll.u32 [#allocation7], 4
      %s55 = int_to_ptr.vmem [resolvable:$true] %s54
      %60 = dma.hbm_to_vmem [thread:$0]  %s53, 256, %s55, [#allocation6], 32, 32, 2
    $region13: #{tpu_custom_call.1} parent=1 // pred_fallthru
      _
    // Predicated region
    $region14: #{tpu_custom_call.1} parent=1 // pred_check
      _
    $region15: #{tpu_custom_call.1} parent=1 // pred_check_branch
      %62 = sbr.rel (0) target = $region17
    $region16: #{tpu_custom_call.1} parent=1 // pred_region
      %64 = vsyncadd [#allocation9], 0
      %s65 = sshll.u32 %s3, 4
      %s66 = int_to_ptr.hbm [resolvable:$true] %s65
      %s67 = sshll.u32 [#allocation8], 4
      %s68 = int_to_ptr.vmem [resolvable:$true] %s67
      %73 = dma.hbm_to_vmem [thread:$0]  %s66, 512, %s68, [#allocation9], 128, 128, 8
    $region17: #{tpu_custom_call.1} parent=1 // pred_fallthru
      _
    // Predicated region
    $region18: #{tpu_custom_call.1} parent=1 // pred_check
      _
    $region19: #{tpu_custom_call.1} parent=1 // pred_check_branch
      %75 = sbr.rel (0) target = $region21
    $region20: #{tpu_custom_call.1} parent=1 // pred_region
      %77 = vsyncadd [#allocation9], 0
      %s78 = sshll.u32 %s4, 4
      %s79 = int_to_ptr.hbm [resolvable:$true] %s78
      %s80 = sshll.u32 [#allocation10], 4
      %s81 = int_to_ptr.vmem [resolvable:$true] %s80
      %86 = dma.hbm_to_vmem [thread:$0]  %s79, 512, %s81, [#allocation9], 128, 128, 8
    $region21: #{tpu_custom_call.1} parent=1 // pred_fallthru
      _
    // Predicated region
    $region22: #{tpu_custom_call.1} parent=1 // pred_check
      _
    $region23: #{tpu_custom_call.1} parent=1 // pred_check_branch
      %88 = sbr.rel (0) target = $region25
    $region24: #{tpu_custom_call.1} parent=1 // pred_region
      %90 = vsyncadd [#allocation12], 0
      %s91 = sshll.u32 %s5, 4
      %s92 = int_to_ptr.hbm [resolvable:$true] %s91
      %s93 = sshll.u32 [#allocation11], 4
      %s94 = int_to_ptr.vmem [resolvable:$true] %s93
      %99 = dma.hbm_to_vmem [thread:$0]  %s92, 512, %s94, [#allocation12], 128, 128, 8
    $region25: #{tpu_custom_call.1} parent=1 // pred_fallthru
      _
    // Predicated region
    $region26: #{tpu_custom_call.1} parent=1 // pred_check
      _
    $region27: #{tpu_custom_call.1} parent=1 // pred_check_branch
      %101 = sbr.rel (0) target = $region29
    $region28: #{tpu_custom_call.1} parent=1 // pred_region
      %103 = vsyncadd [#allocation12], 0
      %s104 = sshll.u32 %s6, 4
      %s105 = int_to_ptr.hbm [resolvable:$true] %s104
      %s106 = sshll.u32 [#allocation13], 4
      %s107 = int_to_ptr.vmem [resolvable:$true] %s106
      %112 = dma.hbm_to_vmem [thread:$0]  %s105, 512, %s107, [#allocation12], 128, 128, 8
    $region29: #{tpu_custom_call.1} parent=1 // pred_fallthru
      _
    // Predicated region
    $region30: #{tpu_custom_call.1} parent=1 // pred_check
      _
    $region31: #{tpu_custom_call.1} parent=1 // pred_check_branch
      %114 = sbr.rel (0) target = $region33
    $region32: #{tpu_custom_call.1} parent=1 // pred_region
      _
    $region33: #{tpu_custom_call.1} parent=1 // pred_fallthru
      _
    // Predicated region
    $region34: #{tpu_custom_call.1} parent=1 // pred_check
      _
    $region35: #{tpu_custom_call.1} parent=1 // pred_check_branch
      %116 = sbr.rel (0) target = $region37
    $region36: #{tpu_custom_call.1} parent=1 // pred_region
      _
    $region37: #{tpu_custom_call.1} parent=1 // pred_fallthru
      _
    // Predicated region
    $region38: #{tpu_custom_call.1} parent=1 // pred_check
      _
    $region39: #{tpu_custom_call.1} parent=1 // pred_check_branch
      %118 = sbr.rel (0) target = $region41
    $region40: #{tpu_custom_call.1} parent=1 // pred_region
      _
    $region41: #{tpu_custom_call.1} parent=1 // pred_fallthru
      _
    // Predicated region
    $region42: #{tpu_custom_call.1} parent=1 // pred_check
      _
    $region43: #{tpu_custom_call.1} parent=1 // pred_check_branch
      %120 = sbr.rel (0) target = $region45
    $region44: #{tpu_custom_call.1} parent=1 // pred_region
      _
    $region45: #{tpu_custom_call.1} parent=1 // pred_fallthru
      _
    // Predicated region
    $region46: #{tpu_custom_call.1} parent=1 // pred_check
      _
    $region47: #{tpu_custom_call.1} parent=1 // pred_check_branch
      %122 = sbr.rel (0) target = $region49
    $region48: #{tpu_custom_call.1} parent=1 // pred_region
      _
    $region49: #{tpu_custom_call.1} parent=1 // pred_fallthru
      _
    // Predicated region
    $region50: #{tpu_custom_call.1} parent=1 // pred_check
      _
    $region51: #{tpu_custom_call.1} parent=1 // pred_check_branch
      %124 = sbr.rel (0) target = $region53
    $region52: #{tpu_custom_call.1} parent=1 // pred_region
      %126 = dma.done [#allocation3], 256
    $region53: #{tpu_custom_call.1} parent=1 // pred_fallthru
      _
    // Predicated region
    $region54: #{tpu_custom_call.1} parent=1 // pred_check
      _
    $region55: #{tpu_custom_call.1} parent=1 // pred_check_branch
      %128 = sbr.rel (0) target = $region57
    $region56: #{tpu_custom_call.1} parent=1 // pred_region
      %130 = dma.done [#allocation6], 256
    $region57: #{tpu_custom_call.1} parent=1 // pred_fallthru
      _
    // Predicated region
    $region58: #{tpu_custom_call.1} parent=1 // pred_check
      _
    $region59: #{tpu_custom_call.1} parent=1 // pred_check_branch
      %132 = sbr.rel (0) target = $region61
    $region60: #{tpu_custom_call.1} parent=1 // pred_region
      %134 = dma.done [#allocation6], 256
    $region61: #{tpu_custom_call.1} parent=1 // pred_fallthru
      _
    // Predicated region
    $region62: #{tpu_custom_call.1} parent=1 // pred_check
      _
    $region63: #{tpu_custom_call.1} parent=1 // pred_check_branch
      %136 = sbr.rel (0) target = $region65
    $region64: #{tpu_custom_call.1} parent=1 // pred_region
      %138 = dma.done [#allocation9], 512
    $region65: #{tpu_custom_call.1} parent=1 // pred_fallthru
      _
    // Predicated region
    $region66: #{tpu_custom_call.1} parent=1 // pred_check
      _
    $region67: #{tpu_custom_call.1} parent=1 // pred_check_branch
      %140 = sbr.rel (0) target = $region69
    $region68: #{tpu_custom_call.1} parent=1 // pred_region
      %142 = dma.done [#allocation9], 512
    $region69: #{tpu_custom_call.1} parent=1 // pred_fallthru
      _
    // Predicated region
    $region70: #{tpu_custom_call.1} parent=1 // pred_check
      _
    $region71: #{tpu_custom_call.1} parent=1 // pred_check_branch
      %144 = sbr.rel (0) target = $region73
    $region72: #{tpu_custom_call.1} parent=1 // pred_region
      %146 = dma.done [#allocation12], 512
    $region73: #{tpu_custom_call.1} parent=1 // pred_fallthru
      _
    // Predicated region
    $region74: #{tpu_custom_call.1} parent=1 // pred_check
      _
    $region75: #{tpu_custom_call.1} parent=1 // pred_check_branch
      %148 = sbr.rel (0) target = $region77
    $region76: #{tpu_custom_call.1} parent=1 // pred_region
      %150 = dma.done [#allocation12], 512
    $region77: #{tpu_custom_call.1} parent=1 // pred_fallthru
      _
    %v151 = vld [vmem:[#allocation2] sm:$0x3]
    %v152 = vld [vmem:[#allocation2 + $0x2] sm:$0x3]
    %v153 = vld [vmem:[#allocation2 + $0x4] sm:$0x3]
    %v154 = vld [vmem:[#allocation2 + $0x6] sm:$0x3]
    %v155 = vld [vmem:[#allocation2 + $0x8] sm:$0x3]
    %v156 = vld [vmem:[#allocation2 + $0xa] sm:$0x3]
    %v157 = vld [vmem:[#allocation2 + $0xc] sm:$0x3]
    %v158 = vld [vmem:[#allocation2 + $0xe] sm:$0x3]
    %v159 = vld [vmem:[#allocation5] sm:$0x3]
    %v160 = vld [vmem:[#allocation5 + $0x2] sm:$0x3]
    %v161 = vld [vmem:[#allocation5 + $0x4] sm:$0x3]
    %v162 = vld [vmem:[#allocation5 + $0x6] sm:$0x3]
    %v163 = vld [vmem:[#allocation5 + $0x8] sm:$0x3]
    %v164 = vld [vmem:[#allocation5 + $0xa] sm:$0x3]
    %v165 = vld [vmem:[#allocation5 + $0xc] sm:$0x3]
    %v166 = vld [vmem:[#allocation5 + $0xe] sm:$0x3]
    %v167 = vadd.f32 %v151, %v159
    %v168 = vadd.f32 %v152, %v160
    %v169 = vadd.f32 %v153, %v161
    %v170 = vadd.f32 %v154, %v162
    %v171 = vadd.f32 %v155, %v163
    %v172 = vadd.f32 %v156, %v164
    %v173 = vadd.f32 %v157, %v165
    %v174 = vadd.f32 %v158, %v166
    %v175 = vld [vmem:[#allocation7] sm:$0x3]
    %v176 = vld [vmem:[#allocation7 + $0x2] sm:$0x3]
    %v177 = vld [vmem:[#allocation7 + $0x4] sm:$0x3]
    %v178 = vld [vmem:[#allocation7 + $0x6] sm:$0x3]
    %v179 = vld [vmem:[#allocation7 + $0x8] sm:$0x3]
    %v180 = vld [vmem:[#allocation7 + $0xa] sm:$0x3]
    %v181 = vld [vmem:[#allocation7 + $0xc] sm:$0x3]
    %v182 = vld [vmem:[#allocation7 + $0xe] sm:$0x3]
    %v183 = vld [vmem:[#allocation8] sm:$0xff]
    %v184 = vld [vmem:[#allocation8 + $0x8] sm:$0xff]
    %v185 = vld [vmem:[#allocation8 + $0x10] sm:$0xff]
    %v186 = vld [vmem:[#allocation8 + $0x18] sm:$0xff]
    %195 = vst [vmem:[#allocation1] ss:$4 sm:$0xff] %v167
    %s196 = scalar_lea.vmem [#allocation1], 1
    %197 = vst [vmem:[%s196] ss:$4 sm:$0xff] %v168
    %s198 = scalar_lea.vmem [#allocation1], 2
    %199 = vst [vmem:[%s198] ss:$4 sm:$0xff] %v169
    %s200 = scalar_lea.vmem [#allocation1], 3
    %201 = vst [vmem:[%s200] ss:$4 sm:$0xff] %v170
    %s202 = scalar_lea.vmem [#allocation1], 32
    %203 = vst [vmem:[%s202] ss:$4 sm:$0xff] %v171
    %s204 = scalar_lea.vmem [#allocation1], 33
    %205 = vst [vmem:[%s204] ss:$4 sm:$0xff] %v172
    %s206 = scalar_lea.vmem [#allocation1], 34
    %207 = vst [vmem:[%s206] ss:$4 sm:$0xff] %v173
    %s208 = scalar_lea.vmem [#allocation1], 35
    %209 = vst [vmem:[%s208] ss:$4 sm:$0xff] %v174
    %v210 = vld.sshfl [vmem:[#allocation1] sm:$0xff pattern:$0x73625140]
    %v211 = vld.sshfl [vmem:[#allocation1 + $0x20] sm:$0xff pattern:$0x73625140]
    %vm212 = vcmask 261120
    %v213 = vsel %vm212, %v210, 0
    %v215 = vsel %vm212, %v211, 0
    %217 = vmatpush.msra.mxu0 0.0
    %218 = vmatpush.msra.mxu0 0.0
    %219 = vmatpush.msra.mxu0 0.0
    %220 = vmatpush.msra.mxu0 0.0
    %221 = vmatpush.msra.mxu0 0.0
    %222 = vmatpush.msra.mxu0 0.0
    %223 = vmatpush.msra.mxu0 0.0
    %224 = vmatpush.msra.mxu0 0.0
    %225 = vmatpush.msra.mxu0 0.0
    %226 = vmatpush.msra.mxu0 0.0
    %227 = vmatpush.msra.mxu0 0.0
    %228 = vmatpush.msra.mxu0 0.0
    %229 = vmatpush.msra.mxu0 %v186
    %230 = vmatpush.msra.mxu0 %v185
    %231 = vmatpush.msra.mxu0 %v184
    %232 = vmatpush.msra.mxu0 %v183
    %233 = vmatmul.f32.gmra.mxu0 %v213
    %v234 = vpop.f32.mrf.mxu0
    %v235 = vadd.f32 0.0, %v234
    %236 = vmatmul.f32.gmra.mxu0 %v215
    %v237 = vpop.f32.mrf.mxu0
    %v238 = vadd.f32 0.0, %v237
    %239 = vdwg.mxu0
    %v240 = vld [vmem:[%s7] sm:$0x1]
    %v242 = vperm.slane %v240, 0
    %v244 = vadd.f32 %v235, %v242
    %v245 = vadd.f32 %v238, %v242
    %v246 = vld [vmem:[#allocation11] sm:$0xff]
    %v247 = vld [vmem:[#allocation11 + $0x8] sm:$0xff]
    %v248 = vld [vmem:[#allocation11 + $0x10] sm:$0xff]
    %v249 = vld [vmem:[#allocation11 + $0x18] sm:$0xff]
    %v250 = vld [vmem:[%s8] sm:$0x1]
    %v252 = vperm.slane %v250, 0
    %262 = vst [vmem:[#allocation1] ss:$4 sm:$0xff] %v151
    %s263 = scalar_lea.vmem [#allocation1], 1
    %264 = vst [vmem:[%s263] ss:$4 sm:$0xff] %v152
    %s265 = scalar_lea.vmem [#allocation1], 2
    %266 = vst [vmem:[%s265] ss:$4 sm:$0xff] %v153
    %s267 = scalar_lea.vmem [#allocation1], 3
    %268 = vst [vmem:[%s267] ss:$4 sm:$0xff] %v154
    %s269 = scalar_lea.vmem [#allocation1], 32
    %270 = vst [vmem:[%s269] ss:$4 sm:$0xff] %v155
    %s271 = scalar_lea.vmem [#allocation1], 33
    %272 = vst [vmem:[%s271] ss:$4 sm:$0xff] %v156
    %s273 = scalar_lea.vmem [#allocation1], 34
    %274 = vst [vmem:[%s273] ss:$4 sm:$0xff] %v157
    %s275 = scalar_lea.vmem [#allocation1], 35
    %276 = vst [vmem:[%s275] ss:$4 sm:$0xff] %v158
    %v277 = vld.sshfl [vmem:[#allocation1] sm:$0xff pattern:$0x73625140]
    %v278 = vld.sshfl [vmem:[#allocation1 + $0x20] sm:$0xff pattern:$0x73625140]
    %v279 = vsel %vm212, %v277, 0
    %v281 = vsel %vm212, %v278, 0
    %283 = vmatpush.msra.mxu0 0.0
    %284 = vmatpush.msra.mxu0 0.0
    %285 = vmatpush.msra.mxu0 0.0
    %286 = vmatpush.msra.mxu0 0.0
    %287 = vmatpush.msra.mxu0 0.0
    %288 = vmatpush.msra.mxu0 0.0
    %289 = vmatpush.msra.mxu0 0.0
    %290 = vmatpush.msra.mxu0 0.0
    %291 = vmatpush.msra.mxu0 0.0
    %292 = vmatpush.msra.mxu0 0.0
    %293 = vmatpush.msra.mxu0 0.0
    %294 = vmatpush.msra.mxu0 0.0
    %295 = vmatpush.msra.mxu0 %v249
    %296 = vmatpush.msra.mxu0 %v248
    %297 = vmatpush.msra.mxu0 %v247
    %298 = vmatpush.msra.mxu0 %v246
    %299 = vmatmul.f32.gmra.mxu0 %v279
    %v300 = vpop.f32.mrf.mxu0
    %v301 = vadd.f32 %v252, %v300
    %302 = vmatmul.f32.gmra.mxu0 %v281
    %v303 = vpop.f32.mrf.mxu0
    %v304 = vadd.f32 %v252, %v303
    %305 = vdwg.mxu0
    %v306 = vld [vmem:[#allocation10] sm:$0xff]
    %v307 = vld [vmem:[#allocation10 + $0x8] sm:$0xff]
    %v308 = vld [vmem:[#allocation10 + $0x10] sm:$0xff]
    %v309 = vld [vmem:[#allocation10 + $0x18] sm:$0xff]
    %314 = vst [vmem:[#allocation1] ss:$4 sm:$0xff] %v175
    %s315 = scalar_lea.vmem [#allocation1], 1
    %316 = vst [vmem:[%s315] ss:$4 sm:$0xff] %v176
    %s317 = scalar_lea.vmem [#allocation1], 2
    %318 = vst [vmem:[%s317] ss:$4 sm:$0xff] %v177
    %s319 = scalar_lea.vmem [#allocation1], 3
    %320 = vst [vmem:[%s319] ss:$4 sm:$0xff] %v178
    %v321 = vld.sshfl [vmem:[#allocation1] sm:$0xff pattern:$0x73625140]
    %v322 = vsel %vm212, %v321, 0
    %324 = vmatpush.msra.mxu0 0.0
    %325 = vmatpush.msra.mxu0 0.0
    %326 = vmatpush.msra.mxu0 0.0
    %327 = vmatpush.msra.mxu0 0.0
    %328 = vmatpush.msra.mxu0 0.0
    %329 = vmatpush.msra.mxu0 0.0
    %330 = vmatpush.msra.mxu0 0.0
    %331 = vmatpush.msra.mxu0 0.0
    %332 = vmatpush.msra.mxu0 0.0
    %333 = vmatpush.msra.mxu0 0.0
    %334 = vmatpush.msra.mxu0 0.0
    %335 = vmatpush.msra.mxu0 0.0
    %336 = vmatpush.msra.mxu0 %v309
    %337 = vmatpush.msra.mxu0 %v308
    %338 = vmatpush.msra.mxu0 %v307
    %339 = vmatpush.msra.mxu0 %v306
    %340 = vmatmul.f32.gmra.mxu0 %v322
    %v341 = vpop.f32.mrf.mxu0
    %v342 = vadd.f32 0.0, %v341
    %343 = vdwg.mxu0
    %348 = vst [vmem:[#allocation1] ss:$4 sm:$0xff] %v179
    %s349 = scalar_lea.vmem [#allocation1], 1
    %350 = vst [vmem:[%s349] ss:$4 sm:$0xff] %v180
    %s351 = scalar_lea.vmem [#allocation1], 2
    %352 = vst [vmem:[%s351] ss:$4 sm:$0xff] %v181
    %s353 = scalar_lea.vmem [#allocation1], 3
    %354 = vst [vmem:[%s353] ss:$4 sm:$0xff] %v182
    %v355 = vld.sshfl [vmem:[#allocation1] sm:$0xff pattern:$0x73625140]
    %v356 = vsel %vm212, %v355, 0
    %358 = vmatpush.msra.mxu0 0.0
    %359 = vmatpush.msra.mxu0 0.0
    %360 = vmatpush.msra.mxu0 0.0
    %361 = vmatpush.msra.mxu0 0.0
    %362 = vmatpush.msra.mxu0 0.0
    %363 = vmatpush.msra.mxu0 0.0
    %364 = vmatpush.msra.mxu0 0.0
    %365 = vmatpush.msra.mxu0 0.0
    %366 = vmatpush.msra.mxu0 0.0
    %367 = vmatpush.msra.mxu0 0.0
    %368 = vmatpush.msra.mxu0 0.0
    %369 = vmatpush.msra.mxu0 0.0
    %370 = vmatpush.msra.mxu0 %v249
    %371 = vmatpush.msra.mxu0 %v248
    %372 = vmatpush.msra.mxu0 %v247
    %373 = vmatpush.msra.mxu0 %v246
    %374 = vmatmul.f32.gmra.mxu0 %v356
    %v375 = vpop.f32.mrf.mxu0
    %v376 = vadd.f32 %v252, %v375
    %377 = vdwg.mxu0
    %380 = vrot.lane.b32.xlu0 %v244, 120
    %v381 = vpop.permute.xlu0 %380
    %382 = vrot.lane.b32.xlu0 %v245, 120
    %v383 = vpop.permute.xlu0 %382
    %386 = vrot.lane.b32.xlu0 %v244, 112
    %v387 = vpop.permute.xlu0 %386
    %388 = vrot.lane.b32.xlu0 %v245, 112
    %v389 = vpop.permute.xlu0 %388
    %392 = vrot.lane.b32.xlu0 %v244, 104
    %v393 = vpop.permute.xlu0 %392
    %394 = vrot.lane.b32.xlu0 %v245, 104
    %v395 = vpop.permute.xlu0 %394
    %v398 = vrot.slane %v387, 4
    %vm399 = vcmask 1047556
    %v400 = vsel %vm399, %v398, %v244
    %v401 = vrot.slane %v244, 4
    %v402 = vsel %vm399, %v387, %v401
    %v404 = vunpack.c.l.s4 1983009808
    %v405 = vunpack.c.0.s8 %v404
    %v406 = vperm.slane %v400, %v405
    %v408 = vunpack.c.l.s4 1983009808
    %v409 = vunpack.c.0.s8 %v408
    %v410 = vperm.slane %v402, %v409
    %v411 = vrot.slane %v393, 4
    %v412 = vsel %vm399, %v411, %v381
    %v413 = vrot.slane %v381, 4
    %v414 = vsel %vm399, %v393, %v413
    %v416 = vunpack.c.l.s4 1983009808
    %v417 = vunpack.c.0.s8 %v416
    %v418 = vperm.slane %v412, %v417
    %v420 = vunpack.c.l.s4 1983009808
    %v421 = vunpack.c.0.s8 %v420
    %v422 = vperm.slane %v414, %v421
    %v423 = vrot.slane %v418, 4
    %v424 = vsel %vm399, %v423, %v406
    %v425 = vrot.slane %v406, 4
    %v426 = vsel %vm399, %v418, %v425
    %v428 = vunpack.c.l.s4 1934713408
    %v429 = vunpack.c.0.s8 %v428
    %v430 = vperm.slane %v424, %v429
    %v432 = vunpack.c.l.s4 1934713408
    %v433 = vunpack.c.0.s8 %v432
    %v434 = vperm.slane %v426, %v433
    %v435 = vrot.slane %v422, 4
    %v436 = vsel %vm399, %v435, %v410
    %v437 = vrot.slane %v410, 4
    %v438 = vsel %vm399, %v422, %v437
    %v440 = vunpack.c.l.s4 1934713408
    %v441 = vunpack.c.0.s8 %v440
    %v442 = vperm.slane %v436, %v441
    %v444 = vunpack.c.l.s4 1934713408
    %v445 = vunpack.c.0.s8 %v444
    %v446 = vperm.slane %v438, %v445
    %v447 = vrot.slane %v430, 4
    %v448 = vsel %vm399, 0.0, %v447
    %v449 = vrot.slane %v434, 4
    %v450 = vsel %vm399, 0.0, %v449
    %v451 = vrot.slane %v442, 4
    %v452 = vsel %vm399, 0.0, %v451
    %v453 = vrot.slane %v446, 4
    %v454 = vsel %vm399, 0.0, %v453
    %v455 = vrot.slane %v389, 4
    %v456 = vsel %vm399, %v455, %v245
    %v457 = vrot.slane %v245, 4
    %v458 = vsel %vm399, %v389, %v457
    %v460 = vunpack.c.l.s4 1983009808
    %v461 = vunpack.c.0.s8 %v460
    %v462 = vperm.slane %v456, %v461
    %v464 = vunpack.c.l.s4 1983009808
    %v465 = vunpack.c.0.s8 %v464
    %v466 = vperm.slane %v458, %v465
    %v467 = vrot.slane %v395, 4
    %v468 = vsel %vm399, %v467, %v383
    %v469 = vrot.slane %v383, 4
    %v470 = vsel %vm399, %v395, %v469
    %v472 = vunpack.c.l.s4 1983009808
    %v473 = vunpack.c.0.s8 %v472
    %v474 = vperm.slane %v468, %v473
    %v476 = vunpack.c.l.s4 1983009808
    %v477 = vunpack.c.0.s8 %v476
    %v478 = vperm.slane %v470, %v477
    %v479 = vrot.slane %v474, 4
    %v480 = vsel %vm399, %v479, %v462
    %v481 = vrot.slane %v462, 4
    %v482 = vsel %vm399, %v474, %v481
    %v484 = vunpack.c.l.s4 1934713408
    %v485 = vunpack.c.0.s8 %v484
    %v486 = vperm.slane %v480, %v485
    %v488 = vunpack.c.l.s4 1934713408
    %v489 = vunpack.c.0.s8 %v488
    %v490 = vperm.slane %v482, %v489
    %v491 = vrot.slane %v478, 4
    %v492 = vsel %vm399, %v491, %v466
    %v493 = vrot.slane %v466, 4
    %v494 = vsel %vm399, %v478, %v493
    %v496 = vunpack.c.l.s4 1934713408
    %v497 = vunpack.c.0.s8 %v496
    %v498 = vperm.slane %v492, %v497
    %v500 = vunpack.c.l.s4 1934713408
    %v501 = vunpack.c.0.s8 %v500
    %v502 = vperm.slane %v494, %v501
    %v503 = vrot.slane %v486, 4
    %v504 = vsel %vm399, 0.0, %v503
    %v505 = vrot.slane %v490, 4
    %v506 = vsel %vm399, 0.0, %v505
    %v507 = vrot.slane %v498, 4
    %v508 = vsel %vm399, 0.0, %v507
    %v509 = vrot.slane %v502, 4
    %v510 = vsel %vm399, 0.0, %v509
    %v511 = vsel %vm399, %v451, %v430
    %v513 = vunpack.c.l.s4 1983009808
    %v514 = vunpack.c.0.s8 %v513
    %v515 = vperm.slane %v511, %v514
    %v516 = vsel %vm399, %v453, %v434
    %v518 = vunpack.c.l.s4 1983009808
    %v519 = vunpack.c.0.s8 %v518
    %v520 = vperm.slane %v516, %v519
    %v521 = vsel %vm399, %v507, %v486
    %v523 = vunpack.c.l.s4 1983009808
    %v524 = vunpack.c.0.s8 %v523
    %v525 = vperm.slane %v521, %v524
    %v526 = vsel %vm399, %v509, %v490
    %v528 = vunpack.c.l.s4 1983009808
    %v529 = vunpack.c.0.s8 %v528
    %v530 = vperm.slane %v526, %v529
    %v531 = vrot.slane %v520, 4
    %v532 = vsel %vm399, %v531, %v515
    %v533 = vrot.slane %v515, 4
    %v534 = vsel %vm399, %v520, %v533
    %v536 = vunpack.c.l.s4 1934713408
    %v537 = vunpack.c.0.s8 %v536
    %v538 = vperm.slane %v532, %v537
    %v540 = vunpack.c.l.s4 1934713408
    %v541 = vunpack.c.0.s8 %v540
    %v542 = vperm.slane %v534, %v541
    %v543 = vrot.slane %v530, 4
    %v544 = vsel %vm399, %v543, %v525
    %v545 = vrot.slane %v525, 4
    %v546 = vsel %vm399, %v530, %v545
    %v548 = vunpack.c.l.s4 1934713408
    %v549 = vunpack.c.0.s8 %v548
    %v550 = vperm.slane %v544, %v549
    %v552 = vunpack.c.l.s4 1934713408
    %v553 = vunpack.c.0.s8 %v552
    %v554 = vperm.slane %v546, %v553
    %v555 = vrot.slane %v550, 4
    %v556 = vsel %vm399, %v555, %v538
    %v557 = vrot.slane %v538, 4
    %v558 = vsel %vm399, %v550, %v557
    %v559 = vrot.slane %v554, 4
    %v560 = vsel %vm399, %v559, %v542
    %v561 = vrot.slane %v542, 4
    %v562 = vsel %vm399, %v554, %v561
    %v563 = vrot.slane %v452, 4
    %v564 = vsel %vm399, %v563, %v448
    %v566 = vunpack.c.l.s4 1983009808
    %v567 = vunpack.c.0.s8 %v566
    %v568 = vperm.slane %v564, %v567
    %v569 = vrot.slane %v454, 4
    %v570 = vsel %vm399, %v569, %v450
    %v572 = vunpack.c.l.s4 1983009808
    %v573 = vunpack.c.0.s8 %v572
    %v574 = vperm.slane %v570, %v573
    %v575 = vrot.slane %v508, 4
    %v576 = vsel %vm399, %v575, %v504
    %v578 = vunpack.c.l.s4 1983009808
    %v579 = vunpack.c.0.s8 %v578
    %v580 = vperm.slane %v576, %v579
    %v581 = vrot.slane %v510, 4
    %v582 = vsel %vm399, %v581, %v506
    %v584 = vunpack.c.l.s4 1983009808
    %v585 = vunpack.c.0.s8 %v584
    %v586 = vperm.slane %v582, %v585
    %v587 = vrot.slane %v574, 4
    %v588 = vsel %vm399, %v587, %v568
    %v589 = vrot.slane %v568, 4
    %v590 = vsel %vm399, %v574, %v589
    %v592 = vunpack.c.l.s4 1934713408
    %v593 = vunpack.c.0.s8 %v592
    %v594 = vperm.slane %v588, %v593
    %v596 = vunpack.c.l.s4 1934713408
    %v597 = vunpack.c.0.s8 %v596
    %v598 = vperm.slane %v590, %v597
    %v599 = vrot.slane %v586, 4
    %v600 = vsel %vm399, %v599, %v580
    %v601 = vrot.slane %v580, 4
    %v602 = vsel %vm399, %v586, %v601
    %v604 = vunpack.c.l.s4 1934713408
    %v605 = vunpack.c.0.s8 %v604
    %v606 = vperm.slane %v600, %v605
    %v608 = vunpack.c.l.s4 1934713408
    %v609 = vunpack.c.0.s8 %v608
    %v610 = vperm.slane %v602, %v609
    %v611 = vrot.slane %v606, 4
    %v612 = vsel %vm399, %v611, %v594
    %v613 = vrot.slane %v594, 4
    %v614 = vsel %vm399, %v606, %v613
    %v615 = vrot.slane %v610, 4
    %v616 = vsel %vm399, %v615, %v598
    %v617 = vrot.slane %v598, 4
    %v618 = vsel %vm399, %v610, %v617
    %621 = vrot.lane.b32.xlu0 %v235, 120
    %v622 = vpop.permute.xlu0 %621
    %623 = vrot.lane.b32.xlu0 %v238, 120
    %v624 = vpop.permute.xlu0 %623
    %625 = vrot.lane.b32.xlu0 %v235, 112
    %v626 = vpop.permute.xlu0 %625
    %627 = vrot.lane.b32.xlu0 %v238, 112
    %v628 = vpop.permute.xlu0 %627
    %629 = vrot.lane.b32.xlu0 %v235, 104
    %v630 = vpop.permute.xlu0 %629
    %631 = vrot.lane.b32.xlu0 %v238, 104
    %v632 = vpop.permute.xlu0 %631
    %633 = vrot.lane.b32.xlu0 %v235, 96
    %v634 = vpop.permute.xlu0 %633
    %635 = vrot.lane.b32.xlu0 %v238, 96
    %v636 = vpop.permute.xlu0 %635
    %637 = vrot.lane.b32.xlu0 %v622, 96
    %v638 = vpop.permute.xlu0 %637
    %639 = vrot.lane.b32.xlu0 %v624, 96
    %v640 = vpop.permute.xlu0 %639
    %641 = vrot.lane.b32.xlu0 %v626, 96
    %v642 = vpop.permute.xlu0 %641
    %643 = vrot.lane.b32.xlu0 %v628, 96
    %v644 = vpop.permute.xlu0 %643
    %645 = vrot.lane.b32.xlu0 %v630, 96
    %v646 = vpop.permute.xlu0 %645
    %647 = vrot.lane.b32.xlu0 %v632, 96
    %v648 = vpop.permute.xlu0 %647
    %v657 = vrot.slane %v642, 4
    %v658 = vsel %vm399, %v657, %v634
    %v659 = vrot.slane %v634, 4
    %v660 = vsel %vm399, %v642, %v659
    %v662 = vunpack.c.l.s4 1983009808
    %v663 = vunpack.c.0.s8 %v662
    %v664 = vperm.slane %v658, %v663
    %v666 = vunpack.c.l.s4 1983009808
    %v667 = vunpack.c.0.s8 %v666
    %v668 = vperm.slane %v660, %v667
    %v669 = vrot.slane %v646, 4
    %v670 = vsel %vm399, %v669, %v638
    %v671 = vrot.slane %v638, 4
    %v672 = vsel %vm399, %v646, %v671
    %v674 = vunpack.c.l.s4 1983009808
    %v675 = vunpack.c.0.s8 %v674
    %v676 = vperm.slane %v670, %v675
    %v678 = vunpack.c.l.s4 1983009808
    %v679 = vunpack.c.0.s8 %v678
    %v680 = vperm.slane %v672, %v679
    %v681 = vrot.slane %v676, 4
    %v682 = vsel %vm399, %v681, %v664
    %v683 = vrot.slane %v664, 4
    %v684 = vsel %vm399, %v676, %v683
    %v686 = vunpack.c.l.s4 1934713408
    %v687 = vunpack.c.0.s8 %v686
    %v688 = vperm.slane %v682, %v687
    %v690 = vunpack.c.l.s4 1934713408
    %v691 = vunpack.c.0.s8 %v690
    %v692 = vperm.slane %v684, %v691
    %v693 = vrot.slane %v680, 4
    %v694 = vsel %vm399, %v693, %v668
    %v695 = vrot.slane %v668, 4
    %v696 = vsel %vm399, %v680, %v695
    %v698 = vunpack.c.l.s4 1934713408
    %v699 = vunpack.c.0.s8 %v698
    %v700 = vperm.slane %v694, %v699
    %v702 = vunpack.c.l.s4 1934713408
    %v703 = vunpack.c.0.s8 %v702
    %v704 = vperm.slane %v696, %v703
    %v705 = vrot.slane %v688, 4
    %v706 = vsel %vm399, 0.0, %v705
    %v707 = vrot.slane %v692, 4
    %v708 = vsel %vm399, 0.0, %v707
    %v709 = vrot.slane %v700, 4
    %v710 = vsel %vm399, 0.0, %v709
    %v711 = vrot.slane %v704, 4
    %v712 = vsel %vm399, 0.0, %v711
    %v713 = vrot.slane %v644, 4
    %v714 = vsel %vm399, %v713, %v636
    %v715 = vrot.slane %v636, 4
    %v716 = vsel %vm399, %v644, %v715
    %v718 = vunpack.c.l.s4 1983009808
    %v719 = vunpack.c.0.s8 %v718
    %v720 = vperm.slane %v714, %v719
    %v722 = vunpack.c.l.s4 1983009808
    %v723 = vunpack.c.0.s8 %v722
    %v724 = vperm.slane %v716, %v723
    %v725 = vrot.slane %v648, 4
    %v726 = vsel %vm399, %v725, %v640
    %v727 = vrot.slane %v640, 4
    %v728 = vsel %vm399, %v648, %v727
    %v730 = vunpack.c.l.s4 1983009808
    %v731 = vunpack.c.0.s8 %v730
    %v732 = vperm.slane %v726, %v731
    %v734 = vunpack.c.l.s4 1983009808
    %v735 = vunpack.c.0.s8 %v734
    %v736 = vperm.slane %v728, %v735
    %v737 = vrot.slane %v732, 4
    %v738 = vsel %vm399, %v737, %v720
    %v739 = vrot.slane %v720, 4
    %v740 = vsel %vm399, %v732, %v739
    %v742 = vunpack.c.l.s4 1934713408
    %v743 = vunpack.c.0.s8 %v742
    %v744 = vperm.slane %v738, %v743
    %v746 = vunpack.c.l.s4 1934713408
    %v747 = vunpack.c.0.s8 %v746
    %v748 = vperm.slane %v740, %v747
    %v749 = vrot.slane %v736, 4
    %v750 = vsel %vm399, %v749, %v724
    %v751 = vrot.slane %v724, 4
    %v752 = vsel %vm399, %v736, %v751
    %v754 = vunpack.c.l.s4 1934713408
    %v755 = vunpack.c.0.s8 %v754
    %v756 = vperm.slane %v750, %v755
    %v758 = vunpack.c.l.s4 1934713408
    %v759 = vunpack.c.0.s8 %v758
    %v760 = vperm.slane %v752, %v759
    %v761 = vrot.slane %v744, 4
    %v762 = vsel %vm399, 0.0, %v761
    %v763 = vrot.slane %v748, 4
    %v764 = vsel %vm399, 0.0, %v763
    %v765 = vrot.slane %v756, 4
    %v766 = vsel %vm399, 0.0, %v765
    %v767 = vrot.slane %v760, 4
    %v768 = vsel %vm399, 0.0, %v767
    %v769 = vsel %vm399, %v709, %v688
    %v771 = vunpack.c.l.s4 1983009808
    %v772 = vunpack.c.0.s8 %v771
    %v773 = vperm.slane %v769, %v772
    %v774 = vsel %vm399, %v711, %v692
    %v776 = vunpack.c.l.s4 1983009808
    %v777 = vunpack.c.0.s8 %v776
    %v778 = vperm.slane %v774, %v777
    %v779 = vsel %vm399, %v765, %v744
    %v781 = vunpack.c.l.s4 1983009808
    %v782 = vunpack.c.0.s8 %v781
    %v783 = vperm.slane %v779, %v782
    %v784 = vsel %vm399, %v767, %v748
    %v786 = vunpack.c.l.s4 1983009808
    %v787 = vunpack.c.0.s8 %v786
    %v788 = vperm.slane %v784, %v787
    %v789 = vrot.slane %v778, 4
    %v790 = vsel %vm399, %v789, %v773
    %v791 = vrot.slane %v773, 4
    %v792 = vsel %vm399, %v778, %v791
    %v794 = vunpack.c.l.s4 1934713408
    %v795 = vunpack.c.0.s8 %v794
    %v796 = vperm.slane %v790, %v795
    %v798 = vunpack.c.l.s4 1934713408
    %v799 = vunpack.c.0.s8 %v798
    %v800 = vperm.slane %v792, %v799
    %v801 = vrot.slane %v788, 4
    %v802 = vsel %vm399, %v801, %v783
    %v803 = vrot.slane %v783, 4
    %v804 = vsel %vm399, %v788, %v803
    %v806 = vunpack.c.l.s4 1934713408
    %v807 = vunpack.c.0.s8 %v806
    %v808 = vperm.slane %v802, %v807
    %v810 = vunpack.c.l.s4 1934713408
    %v811 = vunpack.c.0.s8 %v810
    %v812 = vperm.slane %v804, %v811
    %v813 = vrot.slane %v808, 4
    %v814 = vsel %vm399, %v813, %v796
    %v815 = vrot.slane %v796, 4
    %v816 = vsel %vm399, %v808, %v815
    %v817 = vrot.slane %v812, 4
    %v818 = vsel %vm399, %v817, %v800
    %v819 = vrot.slane %v800, 4
    %v820 = vsel %vm399, %v812, %v819
    %v821 = vrot.slane %v710, 4
    %v822 = vsel %vm399, %v821, %v706
    %v824 = vunpack.c.l.s4 1983009808
    %v825 = vunpack.c.0.s8 %v824
    %v826 = vperm.slane %v822, %v825
    %v827 = vrot.slane %v712, 4
    %v828 = vsel %vm399, %v827, %v708
    %v830 = vunpack.c.l.s4 1983009808
    %v831 = vunpack.c.0.s8 %v830
    %v832 = vperm.slane %v828, %v831
    %v833 = vrot.slane %v766, 4
    %v834 = vsel %vm399, %v833, %v762
    %v836 = vunpack.c.l.s4 1983009808
    %v837 = vunpack.c.0.s8 %v836
    %v838 = vperm.slane %v834, %v837
    %v839 = vrot.slane %v768, 4
    %v840 = vsel %vm399, %v839, %v764
    %v842 = vunpack.c.l.s4 1983009808
    %v843 = vunpack.c.0.s8 %v842
    %v844 = vperm.slane %v840, %v843
    %v845 = vrot.slane %v832, 4
    %v846 = vsel %vm399, %v845, %v826
    %v847 = vrot.slane %v826, 4
    %v848 = vsel %vm399, %v832, %v847
    %v850 = vunpack.c.l.s4 1934713408
    %v851 = vunpack.c.0.s8 %v850
    %v852 = vperm.slane %v846, %v851
    %v854 = vunpack.c.l.s4 1934713408
    %v855 = vunpack.c.0.s8 %v854
    %v856 = vperm.slane %v848, %v855
    %v857 = vrot.slane %v844, 4
    %v858 = vsel %vm399, %v857, %v838
    %v859 = vrot.slane %v838, 4
    %v860 = vsel %vm399, %v844, %v859
    %v862 = vunpack.c.l.s4 1934713408
    %v863 = vunpack.c.0.s8 %v862
    %v864 = vperm.slane %v858, %v863
    %v866 = vunpack.c.l.s4 1934713408
    %v867 = vunpack.c.0.s8 %v866
    %v868 = vperm.slane %v860, %v867
    %v869 = vrot.slane %v864, 4
    %v870 = vsel %vm399, %v869, %v852
    %v871 = vrot.slane %v852, 4
    %v872 = vsel %vm399, %v864, %v871
    %v873 = vrot.slane %v868, 4
    %v874 = vsel %vm399, %v873, %v856
    %v875 = vrot.slane %v856, 4
    %v876 = vsel %vm399, %v868, %v875
    %879 = vrot.lane.b32.xlu0 %v301, 120
    %v880 = vpop.permute.xlu0 %879
    %881 = vrot.lane.b32.xlu0 %v304, 120
    %v882 = vpop.permute.xlu0 %881
    %885 = vrot.lane.b32.xlu0 %v301, 112
    %v886 = vpop.permute.xlu0 %885
    %887 = vrot.lane.b32.xlu0 %v304, 112
    %v888 = vpop.permute.xlu0 %887
    %891 = vrot.lane.b32.xlu0 %v301, 104
    %v892 = vpop.permute.xlu0 %891
    %893 = vrot.lane.b32.xlu0 %v304, 104
    %v894 = vpop.permute.xlu0 %893
    %v897 = vrot.slane %v886, 4
    %v898 = vsel %vm399, %v897, %v301
    %v899 = vrot.slane %v301, 4
    %v900 = vsel %vm399, %v886, %v899
    %v902 = vunpack.c.l.s4 1983009808
    %v903 = vunpack.c.0.s8 %v902
    %v904 = vperm.slane %v898, %v903
    %v906 = vunpack.c.l.s4 1983009808
    %v907 = vunpack.c.0.s8 %v906
    %v908 = vperm.slane %v900, %v907
    %v909 = vrot.slane %v892, 4
    %v910 = vsel %vm399, %v909, %v880
    %v911 = vrot.slane %v880, 4
    %v912 = vsel %vm399, %v892, %v911
    %v914 = vunpack.c.l.s4 1983009808
    %v915 = vunpack.c.0.s8 %v914
    %v916 = vperm.slane %v910, %v915
    %v918 = vunpack.c.l.s4 1983009808
    %v919 = vunpack.c.0.s8 %v918
    %v920 = vperm.slane %v912, %v919
    %v921 = vrot.slane %v916, 4
    %v922 = vsel %vm399, %v921, %v904
    %v923 = vrot.slane %v904, 4
    %v924 = vsel %vm399, %v916, %v923
    %v926 = vunpack.c.l.s4 1934713408
    %v927 = vunpack.c.0.s8 %v926
    %v928 = vperm.slane %v922, %v927
    %v930 = vunpack.c.l.s4 1934713408
    %v931 = vunpack.c.0.s8 %v930
    %v932 = vperm.slane %v924, %v931
    %v933 = vrot.slane %v920, 4
    %v934 = vsel %vm399, %v933, %v908
    %v935 = vrot.slane %v908, 4
    %v936 = vsel %vm399, %v920, %v935
    %v938 = vunpack.c.l.s4 1934713408
    %v939 = vunpack.c.0.s8 %v938
    %v940 = vperm.slane %v934, %v939
    %v942 = vunpack.c.l.s4 1934713408
    %v943 = vunpack.c.0.s8 %v942
    %v944 = vperm.slane %v936, %v943
    %v945 = vrot.slane %v928, 4
    %v946 = vsel %vm399, 0.0, %v945
    %v947 = vrot.slane %v932, 4
    %v948 = vsel %vm399, 0.0, %v947
    %v949 = vrot.slane %v940, 4
    %v950 = vsel %vm399, 0.0, %v949
    %v951 = vrot.slane %v944, 4
    %v952 = vsel %vm399, 0.0, %v951
    %v953 = vrot.slane %v888, 4
    %v954 = vsel %vm399, %v953, %v304
    %v955 = vrot.slane %v304, 4
    %v956 = vsel %vm399, %v888, %v955
    %v958 = vunpack.c.l.s4 1983009808
    %v959 = vunpack.c.0.s8 %v958
    %v960 = vperm.slane %v954, %v959
    %v962 = vunpack.c.l.s4 1983009808
    %v963 = vunpack.c.0.s8 %v962
    %v964 = vperm.slane %v956, %v963
    %v965 = vrot.slane %v894, 4
    %v966 = vsel %vm399, %v965, %v882
    %v967 = vrot.slane %v882, 4
    %v968 = vsel %vm399, %v894, %v967
    %v970 = vunpack.c.l.s4 1983009808
    %v971 = vunpack.c.0.s8 %v970
    %v972 = vperm.slane %v966, %v971
    %v974 = vunpack.c.l.s4 1983009808
    %v975 = vunpack.c.0.s8 %v974
    %v976 = vperm.slane %v968, %v975
    %v977 = vrot.slane %v972, 4
    %v978 = vsel %vm399, %v977, %v960
    %v979 = vrot.slane %v960, 4
    %v980 = vsel %vm399, %v972, %v979
    %v982 = vunpack.c.l.s4 1934713408
    %v983 = vunpack.c.0.s8 %v982
    %v984 = vperm.slane %v978, %v983
    %v986 = vunpack.c.l.s4 1934713408
    %v987 = vunpack.c.0.s8 %v986
    %v988 = vperm.slane %v980, %v987
    %v989 = vrot.slane %v976, 4
    %v990 = vsel %vm399, %v989, %v964
    %v991 = vrot.slane %v964, 4
    %v992 = vsel %vm399, %v976, %v991
    %v994 = vunpack.c.l.s4 1934713408
    %v995 = vunpack.c.0.s8 %v994
    %v996 = vperm.slane %v990, %v995
    %v998 = vunpack.c.l.s4 1934713408
    %v999 = vunpack.c.0.s8 %v998
    %v1000 = vperm.slane %v992, %v999
    %v1001 = vrot.slane %v984, 4
    %v1002 = vsel %vm399, 0.0, %v1001
    %v1003 = vrot.slane %v988, 4
    %v1004 = vsel %vm399, 0.0, %v1003
    %v1005 = vrot.slane %v996, 4
    %v1006 = vsel %vm399, 0.0, %v1005
    %v1007 = vrot.slane %v1000, 4
    %v1008 = vsel %vm399, 0.0, %v1007
    %v1009 = vsel %vm399, %v949, %v928
    %v1011 = vunpack.c.l.s4 1983009808
    %v1012 = vunpack.c.0.s8 %v1011
    %v1013 = vperm.slane %v1009, %v1012
    %v1014 = vsel %vm399, %v951, %v932
    %v1016 = vunpack.c.l.s4 1983009808
    %v1017 = vunpack.c.0.s8 %v1016
    %v1018 = vperm.slane %v1014, %v1017
    %v1019 = vsel %vm399, %v1005, %v984
    %v1021 = vunpack.c.l.s4 1983009808
    %v1022 = vunpack.c.0.s8 %v1021
    %v1023 = vperm.slane %v1019, %v1022
    %v1024 = vsel %vm399, %v1007, %v988
    %v1026 = vunpack.c.l.s4 1983009808
    %v1027 = vunpack.c.0.s8 %v1026
    %v1028 = vperm.slane %v1024, %v1027
    %v1029 = vrot.slane %v1018, 4
    %v1030 = vsel %vm399, %v1029, %v1013
    %v1031 = vrot.slane %v1013, 4
    %v1032 = vsel %vm399, %v1018, %v1031
    %v1034 = vunpack.c.l.s4 1934713408
    %v1035 = vunpack.c.0.s8 %v1034
    %v1036 = vperm.slane %v1030, %v1035
    %v1038 = vunpack.c.l.s4 1934713408
    %v1039 = vunpack.c.0.s8 %v1038
    %v1040 = vperm.slane %v1032, %v1039
    %v1041 = vrot.slane %v1028, 4
    %v1042 = vsel %vm399, %v1041, %v1023
    %v1043 = vrot.slane %v1023, 4
    %v1044 = vsel %vm399, %v1028, %v1043
    %v1046 = vunpack.c.l.s4 1934713408
    %v1047 = vunpack.c.0.s8 %v1046
    %v1048 = vperm.slane %v1042, %v1047
    %v1050 = vunpack.c.l.s4 1934713408
    %v1051 = vunpack.c.0.s8 %v1050
    %v1052 = vperm.slane %v1044, %v1051
    %v1053 = vrot.slane %v1048, 4
    %v1054 = vsel %vm399, %v1053, %v1036
    %v1055 = vrot.slane %v1036, 4
    %v1056 = vsel %vm399, %v1048, %v1055
    %v1057 = vrot.slane %v1052, 4
    %v1058 = vsel %vm399, %v1057, %v1040
    %v1059 = vrot.slane %v1040, 4
    %v1060 = vsel %vm399, %v1052, %v1059
    %v1061 = vrot.slane %v950, 4
    %v1062 = vsel %vm399, %v1061, %v946
    %v1064 = vunpack.c.l.s4 1983009808
    %v1065 = vunpack.c.0.s8 %v1064
    %v1066 = vperm.slane %v1062, %v1065
    %v1067 = vrot.slane %v952, 4
    %v1068 = vsel %vm399, %v1067, %v948
    %v1070 = vunpack.c.l.s4 1983009808
    %v1071 = vunpack.c.0.s8 %v1070
    %v1072 = vperm.slane %v1068, %v1071
    %v1073 = vrot.slane %v1006, 4
    %v1074 = vsel %vm399, %v1073, %v1002
    %v1076 = vunpack.c.l.s4 1983009808
    %v1077 = vunpack.c.0.s8 %v1076
    %v1078 = vperm.slane %v1074, %v1077
    %v1079 = vrot.slane %v1008, 4
    %v1080 = vsel %vm399, %v1079, %v1004
    %v1082 = vunpack.c.l.s4 1983009808
    %v1083 = vunpack.c.0.s8 %v1082
    %v1084 = vperm.slane %v1080, %v1083
    %v1085 = vrot.slane %v1072, 4
    %v1086 = vsel %vm399, %v1085, %v1066
    %v1087 = vrot.slane %v1066, 4
    %v1088 = vsel %vm399, %v1072, %v1087
    %v1090 = vunpack.c.l.s4 1934713408
    %v1091 = vunpack.c.0.s8 %v1090
    %v1092 = vperm.slane %v1086, %v1091
    %v1094 = vunpack.c.l.s4 1934713408
    %v1095 = vunpack.c.0.s8 %v1094
    %v1096 = vperm.slane %v1088, %v1095
    %v1097 = vrot.slane %v1084, 4
    %v1098 = vsel %vm399, %v1097, %v1078
    %v1099 = vrot.slane %v1078, 4
    %v1100 = vsel %vm399, %v1084, %v1099
    %v1102 = vunpack.c.l.s4 1934713408
    %v1103 = vunpack.c.0.s8 %v1102
    %v1104 = vperm.slane %v1098, %v1103
    %v1106 = vunpack.c.l.s4 1934713408
    %v1107 = vunpack.c.0.s8 %v1106
    %v1108 = vperm.slane %v1100, %v1107
    %v1109 = vrot.slane %v1104, 4
    %v1110 = vsel %vm399, %v1109, %v1092
    %v1111 = vrot.slane %v1092, 4
    %v1112 = vsel %vm399, %v1104, %v1111
    %v1113 = vrot.slane %v1108, 4
    %v1114 = vsel %vm399, %v1113, %v1096
    %v1115 = vrot.slane %v1096, 4
    %v1116 = vsel %vm399, %v1108, %v1115
    %1118 = vrot.lane.b32.xlu0 %v342, 120
    %v1119 = vpop.permute.xlu0 %1118
    %1121 = vrot.lane.b32.xlu0 %v342, 112
    %v1122 = vpop.permute.xlu0 %1121
    %1124 = vrot.lane.b32.xlu0 %v342, 104
    %v1125 = vpop.permute.xlu0 %1124
    %v1127 = vrot.slane %v1122, 4
    %v1128 = vsel %vm399, %v1127, %v342
    %v1129 = vrot.slane %v342, 4
    %v1130 = vsel %vm399, %v1122, %v1129
    %v1132 = vunpack.c.l.s4 1983009808
    %v1133 = vunpack.c.0.s8 %v1132
    %v1134 = vperm.slane %v1128, %v1133
    %v1136 = vunpack.c.l.s4 1983009808
    %v1137 = vunpack.c.0.s8 %v1136
    %v1138 = vperm.slane %v1130, %v1137
    %v1139 = vrot.slane %v1125, 4
    %v1140 = vsel %vm399, %v1139, %v1119
    %v1141 = vrot.slane %v1119, 4
    %v1142 = vsel %vm399, %v1125, %v1141
    %v1144 = vunpack.c.l.s4 1983009808
    %v1145 = vunpack.c.0.s8 %v1144
    %v1146 = vperm.slane %v1140, %v1145
    %v1148 = vunpack.c.l.s4 1983009808
    %v1149 = vunpack.c.0.s8 %v1148
    %v1150 = vperm.slane %v1142, %v1149
    %v1151 = vrot.slane %v1146, 4
    %v1152 = vsel %vm399, %v1151, %v1134
    %v1153 = vrot.slane %v1134, 4
    %v1154 = vsel %vm399, %v1146, %v1153
    %v1156 = vunpack.c.l.s4 1934713408
    %v1157 = vunpack.c.0.s8 %v1156
    %v1158 = vperm.slane %v1152, %v1157
    %v1160 = vunpack.c.l.s4 1934713408
    %v1161 = vunpack.c.0.s8 %v1160
    %v1162 = vperm.slane %v1154, %v1161
    %v1163 = vrot.slane %v1150, 4
    %v1164 = vsel %vm399, %v1163, %v1138
    %v1165 = vrot.slane %v1138, 4
    %v1166 = vsel %vm399, %v1150, %v1165
    %v1168 = vunpack.c.l.s4 1934713408
    %v1169 = vunpack.c.0.s8 %v1168
    %v1170 = vperm.slane %v1164, %v1169
    %v1172 = vunpack.c.l.s4 1934713408
    %v1173 = vunpack.c.0.s8 %v1172
    %v1174 = vperm.slane %v1166, %v1173
    %v1175 = vrot.slane %v1158, 4
    %v1176 = vsel %vm399, 0.0, %v1175
    %v1177 = vrot.slane %v1162, 4
    %v1178 = vsel %vm399, 0.0, %v1177
    %v1179 = vrot.slane %v1170, 4
    %v1180 = vsel %vm399, 0.0, %v1179
    %v1181 = vrot.slane %v1174, 4
    %v1182 = vsel %vm399, 0.0, %v1181
    %v1183 = vsel %vm399, %v1179, %v1158
    %v1185 = vunpack.c.l.s4 1983009808
    %v1186 = vunpack.c.0.s8 %v1185
    %v1187 = vperm.slane %v1183, %v1186
    %v1188 = vsel %vm399, %v1181, %v1162
    %v1190 = vunpack.c.l.s4 1983009808
    %v1191 = vunpack.c.0.s8 %v1190
    %v1192 = vperm.slane %v1188, %v1191
    %v1193 = vrot.slane %v1192, 4
    %v1194 = vsel %vm399, %v1193, %v1187
    %v1195 = vrot.slane %v1187, 4
    %v1196 = vsel %vm399, %v1192, %v1195
    %v1198 = vunpack.c.l.s4 1934713408
    %v1199 = vunpack.c.0.s8 %v1198
    %v1200 = vperm.slane %v1194, %v1199
    %v1202 = vunpack.c.l.s4 1934713408
    %v1203 = vunpack.c.0.s8 %v1202
    %v1204 = vperm.slane %v1196, %v1203
    %v1205 = vrot.slane %v1200, 4
    %v1206 = vsel %vm399, 0.0, %v1205
    %v1207 = vrot.slane %v1204, 4
    %v1208 = vsel %vm399, 0.0, %v1207
    %v1209 = vrot.slane %v1180, 4
    %v1210 = vsel %vm399, %v1209, %v1176
    %v1212 = vunpack.c.l.s4 1983009808
    %v1213 = vunpack.c.0.s8 %v1212
    %v1214 = vperm.slane %v1210, %v1213
    %v1215 = vrot.slane %v1182, 4
    %v1216 = vsel %vm399, %v1215, %v1178
    %v1218 = vunpack.c.l.s4 1983009808
    %v1219 = vunpack.c.0.s8 %v1218
    %v1220 = vperm.slane %v1216, %v1219
    %v1221 = vrot.slane %v1220, 4
    %v1222 = vsel %vm399, %v1221, %v1214
    %v1223 = vrot.slane %v1214, 4
    %v1224 = vsel %vm399, %v1220, %v1223
    %v1226 = vunpack.c.l.s4 1934713408
    %v1227 = vunpack.c.0.s8 %v1226
    %v1228 = vperm.slane %v1222, %v1227
    %v1230 = vunpack.c.l.s4 1934713408
    %v1231 = vunpack.c.0.s8 %v1230
    %v1232 = vperm.slane %v1224, %v1231
    %v1233 = vrot.slane %v1228, 4
    %v1234 = vsel %vm399, 0.0, %v1233
    %v1235 = vrot.slane %v1232, 4
    %v1236 = vsel %vm399, 0.0, %v1235
    %1238 = vrot.lane.b32.xlu0 %v376, 120
    %v1239 = vpop.permute.xlu0 %1238
    %1241 = vrot.lane.b32.xlu0 %v376, 112
    %v1242 = vpop.permute.xlu0 %1241
    %1244 = vrot.lane.b32.xlu0 %v376, 104
    %v1245 = vpop.permute.xlu0 %1244
    %v1247 = vrot.slane %v1242, 4
    %v1248 = vsel %vm399, %v1247, %v376
    %v1249 = vrot.slane %v376, 4
    %v1250 = vsel %vm399, %v1242, %v1249
    %v1252 = vunpack.c.l.s4 1983009808
    %v1253 = vunpack.c.0.s8 %v1252
    %v1254 = vperm.slane %v1248, %v1253
    %v1256 = vunpack.c.l.s4 1983009808
    %v1257 = vunpack.c.0.s8 %v1256
    %v1258 = vperm.slane %v1250, %v1257
    %v1259 = vrot.slane %v1245, 4
    %v1260 = vsel %vm399, %v1259, %v1239
    %v1261 = vrot.slane %v1239, 4
    %v1262 = vsel %vm399, %v1245, %v1261
    %v1264 = vunpack.c.l.s4 1983009808
    %v1265 = vunpack.c.0.s8 %v1264
    %v1266 = vperm.slane %v1260, %v1265
    %v1268 = vunpack.c.l.s4 1983009808
    %v1269 = vunpack.c.0.s8 %v1268
    %v1270 = vperm.slane %v1262, %v1269
    %v1271 = vrot.slane %v1266, 4
    %v1272 = vsel %vm399, %v1271, %v1254
    %v1273 = vrot.slane %v1254, 4
    %v1274 = vsel %vm399, %v1266, %v1273
    %v1276 = vunpack.c.l.s4 1934713408
    %v1277 = vunpack.c.0.s8 %v1276
    %v1278 = vperm.slane %v1272, %v1277
    %v1280 = vunpack.c.l.s4 1934713408
    %v1281 = vunpack.c.0.s8 %v1280
    %v1282 = vperm.slane %v1274, %v1281
    %v1283 = vrot.slane %v1270, 4
    %v1284 = vsel %vm399, %v1283, %v1258
    %v1285 = vrot.slane %v1258, 4
    %v1286 = vsel %vm399, %v1270, %v1285
    %v1288 = vunpack.c.l.s4 1934713408
    %v1289 = vunpack.c.0.s8 %v1288
    %v1290 = vperm.slane %v1284, %v1289
    %v1292 = vunpack.c.l.s4 1934713408
    %v1293 = vunpack.c.0.s8 %v1292
    %v1294 = vperm.slane %v1286, %v1293
    %v1295 = vrot.slane %v1278, 4
    %v1296 = vsel %vm399, 0.0, %v1295
    %v1297 = vrot.slane %v1282, 4
    %v1298 = vsel %vm399, 0.0, %v1297
    %v1299 = vrot.slane %v1290, 4
    %v1300 = vsel %vm399, 0.0, %v1299
    %v1301 = vrot.slane %v1294, 4
    %v1302 = vsel %vm399, 0.0, %v1301
    %v1303 = vsel %vm399, %v1299, %v1278
    %v1305 = vunpack.c.l.s4 1983009808
    %v1306 = vunpack.c.0.s8 %v1305
    %v1307 = vperm.slane %v1303, %v1306
    %v1308 = vsel %vm399, %v1301, %v1282
    %v1310 = vunpack.c.l.s4 1983009808
    %v1311 = vunpack.c.0.s8 %v1310
    %v1312 = vperm.slane %v1308, %v1311
    %v1313 = vrot.slane %v1312, 4
    %v1314 = vsel %vm399, %v1313, %v1307
    %v1315 = vrot.slane %v1307, 4
    %v1316 = vsel %vm399, %v1312, %v1315
    %v1318 = vunpack.c.l.s4 1934713408
    %v1319 = vunpack.c.0.s8 %v1318
    %v1320 = vperm.slane %v1314, %v1319
    %v1322 = vunpack.c.l.s4 1934713408
    %v1323 = vunpack.c.0.s8 %v1322
    %v1324 = vperm.slane %v1316, %v1323
    %v1325 = vrot.slane %v1320, 4
    %v1326 = vsel %vm399, 0.0, %v1325
    %v1327 = vrot.slane %v1324, 4
    %v1328 = vsel %vm399, 0.0, %v1327
    %v1329 = vrot.slane %v1300, 4
    %v1330 = vsel %vm399, %v1329, %v1296
    %v1332 = vunpack.c.l.s4 1983009808
    %v1333 = vunpack.c.0.s8 %v1332
    %v1334 = vperm.slane %v1330, %v1333
    %v1335 = vrot.slane %v1302, 4
    %v1336 = vsel %vm399, %v1335, %v1298
    %v1338 = vunpack.c.l.s4 1983009808
    %v1339 = vunpack.c.0.s8 %v1338
    %v1340 = vperm.slane %v1336, %v1339
    %v1341 = vrot.slane %v1340, 4
    %v1342 = vsel %vm399, %v1341, %v1334
    %v1343 = vrot.slane %v1334, 4
    %v1344 = vsel %vm399, %v1340, %v1343
    %v1346 = vunpack.c.l.s4 1934713408
    %v1347 = vunpack.c.0.s8 %v1346
    %v1348 = vperm.slane %v1342, %v1347
    %v1350 = vunpack.c.l.s4 1934713408
    %v1351 = vunpack.c.0.s8 %v1350
    %v1352 = vperm.slane %v1344, %v1351
    %v1353 = vrot.slane %v1348, 4
    %v1354 = vsel %vm399, 0.0, %v1353
    %v1355 = vrot.slane %v1352, 4
    %v1356 = vsel %vm399, 0.0, %v1355
    %vm1357 = vcmask 64512
    %v1359 = vsel %vm1357, %v556, 0
    %v1362 = vsel %vm1357, %v814, 0
    %1364 = vmatpush.xpose.msra.mxu0 0.0
    %1365 = vmatpush.xpose.msra.mxu0 0.0
    %1366 = vmatpush.xpose.msra.mxu0 0.0
    %1367 = vmatpush.xpose.msra.mxu0 0.0
    %1368 = vmatpush.xpose.msra.mxu0 0.0
    %1369 = vmatpush.xpose.msra.mxu0 0.0
    %1370 = vmatpush.xpose.msra.mxu0 0.0
    %1371 = vmatpush.xpose.msra.mxu0 0.0
    %1372 = vmatpush.xpose.msra.mxu0 0.0
    %1373 = vmatpush.xpose.msra.mxu0 0.0
    %1374 = vmatpush.xpose.msra.mxu0 0.0
    %1375 = vmatpush.xpose.msra.mxu0 0.0
    %1376 = vmatpush.xpose.msra.mxu0 0.0
    %1377 = vmatpush.xpose.msra.mxu0 0.0
    %1378 = vmatpush.xpose.msra.mxu0 0.0
    %1379 = vmatpush.xpose.msra.mxu0 %v1362
    %1380 = vmatmul.f32.gmra.mxu0 %v1359
    %v1381 = vpop.f32.mrf.mxu0
    %v1382 = vadd.f32 0.0, %v1381
    %1383 = vdwg.mxu0
    %v1385 = vsel %vm1357, %v558, 0
    %v1388 = vsel %vm1357, %v816, 0
    %1390 = vmatpush.xpose.msra.mxu0 0.0
    %1391 = vmatpush.xpose.msra.mxu0 0.0
    %1392 = vmatpush.xpose.msra.mxu0 0.0
    %1393 = vmatpush.xpose.msra.mxu0 0.0
    %1394 = vmatpush.xpose.msra.mxu0 0.0
    %1395 = vmatpush.xpose.msra.mxu0 0.0
    %1396 = vmatpush.xpose.msra.mxu0 0.0
    %1397 = vmatpush.xpose.msra.mxu0 0.0
    %1398 = vmatpush.xpose.msra.mxu0 0.0
    %1399 = vmatpush.xpose.msra.mxu0 0.0
    %1400 = vmatpush.xpose.msra.mxu0 0.0
    %1401 = vmatpush.xpose.msra.mxu0 0.0
    %1402 = vmatpush.xpose.msra.mxu0 0.0
    %1403 = vmatpush.xpose.msra.mxu0 0.0
    %1404 = vmatpush.xpose.msra.mxu0 0.0
    %1405 = vmatpush.xpose.msra.mxu0 %v1388
    %1406 = vmatmul.f32.gmra.mxu0 %v1385
    %v1407 = vpop.f32.mrf.mxu0
    %v1408 = vadd.f32 0.0, %v1407
    %1409 = vdwg.mxu0
    %v1411 = vsel %vm1357, %v560, 0
    %v1414 = vsel %vm1357, %v818, 0
    %1416 = vmatpush.xpose.msra.mxu0 0.0
    %1417 = vmatpush.xpose.msra.mxu0 0.0
    %1418 = vmatpush.xpose.msra.mxu0 0.0
    %1419 = vmatpush.xpose.msra.mxu0 0.0
    %1420 = vmatpush.xpose.msra.mxu0 0.0
    %1421 = vmatpush.xpose.msra.mxu0 0.0
    %1422 = vmatpush.xpose.msra.mxu0 0.0
    %1423 = vmatpush.xpose.msra.mxu0 0.0
    %1424 = vmatpush.xpose.msra.mxu0 0.0
    %1425 = vmatpush.xpose.msra.mxu0 0.0
    %1426 = vmatpush.xpose.msra.mxu0 0.0
    %1427 = vmatpush.xpose.msra.mxu0 0.0
    %1428 = vmatpush.xpose.msra.mxu0 0.0
    %1429 = vmatpush.xpose.msra.mxu0 0.0
    %1430 = vmatpush.xpose.msra.mxu0 0.0
    %1431 = vmatpush.xpose.msra.mxu0 %v1414
    %1432 = vmatmul.f32.gmra.mxu0 %v1411
    %v1433 = vpop.f32.mrf.mxu0
    %v1434 = vadd.f32 0.0, %v1433
    %1435 = vdwg.mxu0
    %v1437 = vsel %vm1357, %v562, 0
    %v1440 = vsel %vm1357, %v820, 0
    %1442 = vmatpush.xpose.msra.mxu0 0.0
    %1443 = vmatpush.xpose.msra.mxu0 0.0
    %1444 = vmatpush.xpose.msra.mxu0 0.0
    %1445 = vmatpush.xpose.msra.mxu0 0.0
    %1446 = vmatpush.xpose.msra.mxu0 0.0
    %1447 = vmatpush.xpose.msra.mxu0 0.0
    %1448 = vmatpush.xpose.msra.mxu0 0.0
    %1449 = vmatpush.xpose.msra.mxu0 0.0
    %1450 = vmatpush.xpose.msra.mxu0 0.0
    %1451 = vmatpush.xpose.msra.mxu0 0.0
    %1452 = vmatpush.xpose.msra.mxu0 0.0
    %1453 = vmatpush.xpose.msra.mxu0 0.0
    %1454 = vmatpush.xpose.msra.mxu0 0.0
    %1455 = vmatpush.xpose.msra.mxu0 0.0
    %1456 = vmatpush.xpose.msra.mxu0 0.0
    %1457 = vmatpush.xpose.msra.mxu0 %v1440
    %1458 = vmatmul.f32.gmra.mxu0 %v1437
    %v1459 = vpop.f32.mrf.mxu0
    %v1460 = vadd.f32 0.0, %v1459
    %1461 = vdwg.mxu0
    %v1463 = vsel %vm1357, %v612, 0
    %v1466 = vsel %vm1357, %v870, 0
    %1468 = vmatpush.xpose.msra.mxu0 0.0
    %1469 = vmatpush.xpose.msra.mxu0 0.0
    %1470 = vmatpush.xpose.msra.mxu0 0.0
    %1471 = vmatpush.xpose.msra.mxu0 0.0
    %1472 = vmatpush.xpose.msra.mxu0 0.0
    %1473 = vmatpush.xpose.msra.mxu0 0.0
    %1474 = vmatpush.xpose.msra.mxu0 0.0
    %1475 = vmatpush.xpose.msra.mxu0 0.0
    %1476 = vmatpush.xpose.msra.mxu0 0.0
    %1477 = vmatpush.xpose.msra.mxu0 0.0
    %1478 = vmatpush.xpose.msra.mxu0 0.0
    %1479 = vmatpush.xpose.msra.mxu0 0.0
    %1480 = vmatpush.xpose.msra.mxu0 0.0
    %1481 = vmatpush.xpose.msra.mxu0 0.0
    %1482 = vmatpush.xpose.msra.mxu0 0.0
    %1483 = vmatpush.xpose.msra.mxu0 %v1466
    %1484 = vmatmul.f32.gmra.mxu0 %v1463
    %v1485 = vpop.f32.mrf.mxu0
    %v1486 = vadd.f32 0.0, %v1485
    %1487 = vdwg.mxu0
    %v1489 = vsel %vm1357, %v614, 0
    %v1492 = vsel %vm1357, %v872, 0
    %1494 = vmatpush.xpose.msra.mxu0 0.0
    %1495 = vmatpush.xpose.msra.mxu0 0.0
    %1496 = vmatpush.xpose.msra.mxu0 0.0
    %1497 = vmatpush.xpose.msra.mxu0 0.0
    %1498 = vmatpush.xpose.msra.mxu0 0.0
    %1499 = vmatpush.xpose.msra.mxu0 0.0
    %1500 = vmatpush.xpose.msra.mxu0 0.0
    %1501 = vmatpush.xpose.msra.mxu0 0.0
    %1502 = vmatpush.xpose.msra.mxu0 0.0
    %1503 = vmatpush.xpose.msra.mxu0 0.0
    %1504 = vmatpush.xpose.msra.mxu0 0.0
    %1505 = vmatpush.xpose.msra.mxu0 0.0
    %1506 = vmatpush.xpose.msra.mxu0 0.0
    %1507 = vmatpush.xpose.msra.mxu0 0.0
    %1508 = vmatpush.xpose.msra.mxu0 0.0
    %1509 = vmatpush.xpose.msra.mxu0 %v1492
    %1510 = vmatmul.f32.gmra.mxu0 %v1489
    %v1511 = vpop.f32.mrf.mxu0
    %v1512 = vadd.f32 0.0, %v1511
    %1513 = vdwg.mxu0
    %v1515 = vsel %vm1357, %v616, 0
    %v1518 = vsel %vm1357, %v874, 0
    %1520 = vmatpush.xpose.msra.mxu0 0.0
    %1521 = vmatpush.xpose.msra.mxu0 0.0
    %1522 = vmatpush.xpose.msra.mxu0 0.0
    %1523 = vmatpush.xpose.msra.mxu0 0.0
    %1524 = vmatpush.xpose.msra.mxu0 0.0
    %1525 = vmatpush.xpose.msra.mxu0 0.0
    %1526 = vmatpush.xpose.msra.mxu0 0.0
    %1527 = vmatpush.xpose.msra.mxu0 0.0
    %1528 = vmatpush.xpose.msra.mxu0 0.0
    %1529 = vmatpush.xpose.msra.mxu0 0.0
    %1530 = vmatpush.xpose.msra.mxu0 0.0
    %1531 = vmatpush.xpose.msra.mxu0 0.0
    %1532 = vmatpush.xpose.msra.mxu0 0.0
    %1533 = vmatpush.xpose.msra.mxu0 0.0
    %1534 = vmatpush.xpose.msra.mxu0 0.0
    %1535 = vmatpush.xpose.msra.mxu0 %v1518
    %1536 = vmatmul.f32.gmra.mxu0 %v1515
    %v1537 = vpop.f32.mrf.mxu0
    %v1538 = vadd.f32 0.0, %v1537
    %1539 = vdwg.mxu0
    %v1541 = vsel %vm1357, %v618, 0
    %v1544 = vsel %vm1357, %v876, 0
    %1546 = vmatpush.xpose.msra.mxu0 0.0
    %1547 = vmatpush.xpose.msra.mxu0 0.0
    %1548 = vmatpush.xpose.msra.mxu0 0.0
    %1549 = vmatpush.xpose.msra.mxu0 0.0
    %1550 = vmatpush.xpose.msra.mxu0 0.0
    %1551 = vmatpush.xpose.msra.mxu0 0.0
    %1552 = vmatpush.xpose.msra.mxu0 0.0
    %1553 = vmatpush.xpose.msra.mxu0 0.0
    %1554 = vmatpush.xpose.msra.mxu0 0.0
    %1555 = vmatpush.xpose.msra.mxu0 0.0
    %1556 = vmatpush.xpose.msra.mxu0 0.0
    %1557 = vmatpush.xpose.msra.mxu0 0.0
    %1558 = vmatpush.xpose.msra.mxu0 0.0
    %1559 = vmatpush.xpose.msra.mxu0 0.0
    %1560 = vmatpush.xpose.msra.mxu0 0.0
    %1561 = vmatpush.xpose.msra.mxu0 %v1544
    %1562 = vmatmul.f32.gmra.mxu0 %v1541
    %v1563 = vpop.f32.mrf.mxu0
    %v1564 = vadd.f32 0.0, %v1563
    %1565 = vdwg.mxu0
    %v1567 = vsel %vm1357, %v1200, 0
    %1569 = vmatpush.xpose.msra.mxu0 0.0
    %1570 = vmatpush.xpose.msra.mxu0 0.0
    %1571 = vmatpush.xpose.msra.mxu0 0.0
    %1572 = vmatpush.xpose.msra.mxu0 0.0
    %1573 = vmatpush.xpose.msra.mxu0 0.0
    %1574 = vmatpush.xpose.msra.mxu0 0.0
    %1575 = vmatpush.xpose.msra.mxu0 0.0
    %1576 = vmatpush.xpose.msra.mxu0 0.0
    %1577 = vmatpush.xpose.msra.mxu0 0.0
    %1578 = vmatpush.xpose.msra.mxu0 0.0
    %1579 = vmatpush.xpose.msra.mxu0 0.0
    %1580 = vmatpush.xpose.msra.mxu0 0.0
    %1581 = vmatpush.xpose.msra.mxu0 0.0
    %1582 = vmatpush.xpose.msra.mxu0 0.0
    %1583 = vmatpush.xpose.msra.mxu0 0.0
    %1584 = vmatpush.xpose.msra.mxu0 %v1567
    %1585 = vmatmul.f32.gmra.mxu0 %v1359
    %v1586 = vpop.f32.mrf.mxu0
    %v1587 = vadd.f32 0.0, %v1586
    %1588 = vdwg.mxu0
    %v1590 = vsel %vm1357, %v1206, 0
    %1592 = vmatpush.xpose.msra.mxu0 0.0
    %1593 = vmatpush.xpose.msra.mxu0 0.0
    %1594 = vmatpush.xpose.msra.mxu0 0.0
    %1595 = vmatpush.xpose.msra.mxu0 0.0
    %1596 = vmatpush.xpose.msra.mxu0 0.0
    %1597 = vmatpush.xpose.msra.mxu0 0.0
    %1598 = vmatpush.xpose.msra.mxu0 0.0
    %1599 = vmatpush.xpose.msra.mxu0 0.0
    %1600 = vmatpush.xpose.msra.mxu0 0.0
    %1601 = vmatpush.xpose.msra.mxu0 0.0
    %1602 = vmatpush.xpose.msra.mxu0 0.0
    %1603 = vmatpush.xpose.msra.mxu0 0.0
    %1604 = vmatpush.xpose.msra.mxu0 0.0
    %1605 = vmatpush.xpose.msra.mxu0 0.0
    %1606 = vmatpush.xpose.msra.mxu0 0.0
    %1607 = vmatpush.xpose.msra.mxu0 %v1590
    %1608 = vmatmul.f32.gmra.mxu0 %v1385
    %v1609 = vpop.f32.mrf.mxu0
    %v1610 = vadd.f32 0.0, %v1609
    %1611 = vdwg.mxu0
    %v1613 = vsel %vm1357, %v1204, 0
    %1615 = vmatpush.xpose.msra.mxu0 0.0
    %1616 = vmatpush.xpose.msra.mxu0 0.0
    %1617 = vmatpush.xpose.msra.mxu0 0.0
    %1618 = vmatpush.xpose.msra.mxu0 0.0
    %1619 = vmatpush.xpose.msra.mxu0 0.0
    %1620 = vmatpush.xpose.msra.mxu0 0.0
    %1621 = vmatpush.xpose.msra.mxu0 0.0
    %1622 = vmatpush.xpose.msra.mxu0 0.0
    %1623 = vmatpush.xpose.msra.mxu0 0.0
    %1624 = vmatpush.xpose.msra.mxu0 0.0
    %1625 = vmatpush.xpose.msra.mxu0 0.0
    %1626 = vmatpush.xpose.msra.mxu0 0.0
    %1627 = vmatpush.xpose.msra.mxu0 0.0
    %1628 = vmatpush.xpose.msra.mxu0 0.0
    %1629 = vmatpush.xpose.msra.mxu0 0.0
    %1630 = vmatpush.xpose.msra.mxu0 %v1613
    %1631 = vmatmul.f32.gmra.mxu0 %v1411
    %v1632 = vpop.f32.mrf.mxu0
    %v1633 = vadd.f32 0.0, %v1632
    %1634 = vdwg.mxu0
    %v1636 = vsel %vm1357, %v1208, 0
    %1638 = vmatpush.xpose.msra.mxu0 0.0
    %1639 = vmatpush.xpose.msra.mxu0 0.0
    %1640 = vmatpush.xpose.msra.mxu0 0.0
    %1641 = vmatpush.xpose.msra.mxu0 0.0
    %1642 = vmatpush.xpose.msra.mxu0 0.0
    %1643 = vmatpush.xpose.msra.mxu0 0.0
    %1644 = vmatpush.xpose.msra.mxu0 0.0
    %1645 = vmatpush.xpose.msra.mxu0 0.0
    %1646 = vmatpush.xpose.msra.mxu0 0.0
    %1647 = vmatpush.xpose.msra.mxu0 0.0
    %1648 = vmatpush.xpose.msra.mxu0 0.0
    %1649 = vmatpush.xpose.msra.mxu0 0.0
    %1650 = vmatpush.xpose.msra.mxu0 0.0
    %1651 = vmatpush.xpose.msra.mxu0 0.0
    %1652 = vmatpush.xpose.msra.mxu0 0.0
    %1653 = vmatpush.xpose.msra.mxu0 %v1636
    %1654 = vmatmul.f32.gmra.mxu0 %v1437
    %v1655 = vpop.f32.mrf.mxu0
    %v1656 = vadd.f32 0.0, %v1655
    %1657 = vdwg.mxu0
    %v1659 = vsel %vm1357, %v1228, 0
    %1661 = vmatpush.xpose.msra.mxu0 0.0
    %1662 = vmatpush.xpose.msra.mxu0 0.0
    %1663 = vmatpush.xpose.msra.mxu0 0.0
    %1664 = vmatpush.xpose.msra.mxu0 0.0
    %1665 = vmatpush.xpose.msra.mxu0 0.0
    %1666 = vmatpush.xpose.msra.mxu0 0.0
    %1667 = vmatpush.xpose.msra.mxu0 0.0
    %1668 = vmatpush.xpose.msra.mxu0 0.0
    %1669 = vmatpush.xpose.msra.mxu0 0.0
    %1670 = vmatpush.xpose.msra.mxu0 0.0
    %1671 = vmatpush.xpose.msra.mxu0 0.0
    %1672 = vmatpush.xpose.msra.mxu0 0.0
    %1673 = vmatpush.xpose.msra.mxu0 0.0
    %1674 = vmatpush.xpose.msra.mxu0 0.0
    %1675 = vmatpush.xpose.msra.mxu0 0.0
    %1676 = vmatpush.xpose.msra.mxu0 %v1659
    %1677 = vmatmul.f32.gmra.mxu0 %v1463
    %v1678 = vpop.f32.mrf.mxu0
    %v1679 = vadd.f32 0.0, %v1678
    %1680 = vdwg.mxu0
    %v1682 = vsel %vm1357, %v1234, 0
    %1684 = vmatpush.xpose.msra.mxu0 0.0
    %1685 = vmatpush.xpose.msra.mxu0 0.0
    %1686 = vmatpush.xpose.msra.mxu0 0.0
    %1687 = vmatpush.xpose.msra.mxu0 0.0
    %1688 = vmatpush.xpose.msra.mxu0 0.0
    %1689 = vmatpush.xpose.msra.mxu0 0.0
    %1690 = vmatpush.xpose.msra.mxu0 0.0
    %1691 = vmatpush.xpose.msra.mxu0 0.0
    %1692 = vmatpush.xpose.msra.mxu0 0.0
    %1693 = vmatpush.xpose.msra.mxu0 0.0
    %1694 = vmatpush.xpose.msra.mxu0 0.0
    %1695 = vmatpush.xpose.msra.mxu0 0.0
    %1696 = vmatpush.xpose.msra.mxu0 0.0
    %1697 = vmatpush.xpose.msra.mxu0 0.0
    %1698 = vmatpush.xpose.msra.mxu0 0.0
    %1699 = vmatpush.xpose.msra.mxu0 %v1682
    %1700 = vmatmul.f32.gmra.mxu0 %v1489
    %v1701 = vpop.f32.mrf.mxu0
    %v1702 = vadd.f32 0.0, %v1701
    %1703 = vdwg.mxu0
    %v1705 = vsel %vm1357, %v1232, 0
    %1707 = vmatpush.xpose.msra.mxu0 0.0
    %1708 = vmatpush.xpose.msra.mxu0 0.0
    %1709 = vmatpush.xpose.msra.mxu0 0.0
    %1710 = vmatpush.xpose.msra.mxu0 0.0
    %1711 = vmatpush.xpose.msra.mxu0 0.0
    %1712 = vmatpush.xpose.msra.mxu0 0.0
    %1713 = vmatpush.xpose.msra.mxu0 0.0
    %1714 = vmatpush.xpose.msra.mxu0 0.0
    %1715 = vmatpush.xpose.msra.mxu0 0.0
    %1716 = vmatpush.xpose.msra.mxu0 0.0
    %1717 = vmatpush.xpose.msra.mxu0 0.0
    %1718 = vmatpush.xpose.msra.mxu0 0.0
    %1719 = vmatpush.xpose.msra.mxu0 0.0
    %1720 = vmatpush.xpose.msra.mxu0 0.0
    %1721 = vmatpush.xpose.msra.mxu0 0.0
    %1722 = vmatpush.xpose.msra.mxu0 %v1705
    %1723 = vmatmul.f32.gmra.mxu0 %v1515
    %v1724 = vpop.f32.mrf.mxu0
    %v1725 = vadd.f32 0.0, %v1724
    %1726 = vdwg.mxu0
    %v1728 = vsel %vm1357, %v1236, 0
    %1730 = vmatpush.xpose.msra.mxu0 0.0
    %1731 = vmatpush.xpose.msra.mxu0 0.0
    %1732 = vmatpush.xpose.msra.mxu0 0.0
    %1733 = vmatpush.xpose.msra.mxu0 0.0
    %1734 = vmatpush.xpose.msra.mxu0 0.0
    %1735 = vmatpush.xpose.msra.mxu0 0.0
    %1736 = vmatpush.xpose.msra.mxu0 0.0
    %1737 = vmatpush.xpose.msra.mxu0 0.0
    %1738 = vmatpush.xpose.msra.mxu0 0.0
    %1739 = vmatpush.xpose.msra.mxu0 0.0
    %1740 = vmatpush.xpose.msra.mxu0 0.0
    %1741 = vmatpush.xpose.msra.mxu0 0.0
    %1742 = vmatpush.xpose.msra.mxu0 0.0
    %1743 = vmatpush.xpose.msra.mxu0 0.0
    %1744 = vmatpush.xpose.msra.mxu0 0.0
    %1745 = vmatpush.xpose.msra.mxu0 %v1728
    %1746 = vmatmul.f32.gmra.mxu0 %v1541
    %v1747 = vpop.f32.mrf.mxu0
    %v1748 = vadd.f32 0.0, %v1747
    %1749 = vdwg.mxu0
    %v1750 = vsel %vm1357, %v1382, -inf
    %1751 = vmax.xlane.f32.xlu0 %v1750
    %v1752 = vpop.xlane.xlu0 %1751
    %v1753 = vsel %vm1357, %v1408, -inf
    %1754 = vmax.xlane.f32.xlu0 %v1753
    %v1755 = vpop.xlane.xlu0 %1754
    %v1756 = vsel %vm1357, %v1434, -inf
    %1757 = vmax.xlane.f32.xlu0 %v1756
    %v1758 = vpop.xlane.xlu0 %1757
    %v1759 = vsel %vm1357, %v1460, -inf
    %1760 = vmax.xlane.f32.xlu0 %v1759
    %v1761 = vpop.xlane.xlu0 %1760
    %v1762 = vsel %vm1357, %v1486, -inf
    %1763 = vmax.xlane.f32.xlu0 %v1762
    %v1764 = vpop.xlane.xlu0 %1763
    %v1765 = vsel %vm1357, %v1512, -inf
    %1766 = vmax.xlane.f32.xlu0 %v1765
    %v1767 = vpop.xlane.xlu0 %1766
    %v1768 = vsel %vm1357, %v1538, -inf
    %1769 = vmax.xlane.f32.xlu0 %v1768
    %v1770 = vpop.xlane.xlu0 %1769
    %v1771 = vsel %vm1357, %v1564, -inf
    %1772 = vmax.xlane.f32.xlu0 %v1771
    %v1773 = vpop.xlane.xlu0 %1772
    %vm1774 = vcmask 31744
    %v1775 = vsel %vm1774, %v1587, -inf
    %1776 = vmax.xlane.f32.xlu0 %v1775
    %v1777 = vpop.xlane.xlu0 %1776
    %v1778 = vsel %vm1774, %v1610, -inf
    %1779 = vmax.xlane.f32.xlu0 %v1778
    %v1780 = vpop.xlane.xlu0 %1779
    %v1781 = vsel %vm1774, %v1633, -inf
    %1782 = vmax.xlane.f32.xlu0 %v1781
    %v1783 = vpop.xlane.xlu0 %1782
    %v1784 = vsel %vm1774, %v1656, -inf
    %1785 = vmax.xlane.f32.xlu0 %v1784
    %v1786 = vpop.xlane.xlu0 %1785
    %v1787 = vsel %vm1774, %v1679, -inf
    %1788 = vmax.xlane.f32.xlu0 %v1787
    %v1789 = vpop.xlane.xlu0 %1788
    %v1790 = vsel %vm1774, %v1702, -inf
    %1791 = vmax.xlane.f32.xlu0 %v1790
    %v1792 = vpop.xlane.xlu0 %1791
    %v1793 = vsel %vm1774, %v1725, -inf
    %1794 = vmax.xlane.f32.xlu0 %v1793
    %v1795 = vpop.xlane.xlu0 %1794
    %v1796 = vsel %vm1774, %v1748, -inf
    %1797 = vmax.xlane.f32.xlu0 %v1796
    %v1798 = vpop.xlane.xlu0 %1797
    %v1799 = vmax.f32 %v1752, %v1777
    %v1800 = vmax.f32 %v1755, %v1780
    %v1801 = vmax.f32 %v1758, %v1783
    %v1802 = vmax.f32 %v1761, %v1786
    %v1803 = vmax.f32 %v1764, %v1789
    %v1804 = vmax.f32 %v1767, %v1792
    %v1805 = vmax.f32 %v1770, %v1795
    %v1806 = vmax.f32 %v1773, %v1798
    %v1807 = vsub.f32 %v1382, %v1799
    %v1808 = vsub.f32 %v1408, %v1800
    %v1809 = vsub.f32 %v1434, %v1801
    %v1810 = vsub.f32 %v1460, %v1802
    %v1811 = vsub.f32 %v1486, %v1803
    %v1812 = vsub.f32 %v1512, %v1804
    %v1813 = vsub.f32 %v1538, %v1805
    %v1814 = vsub.f32 %v1564, %v1806
    %v1815 = vmul.f32 %v1807, 1.442695
    %v1816 = vpow.pop %v1815
    %v1817 = vmul.f32 %v1808, 1.442695
    %v1818 = vpow.pop %v1817
    %v1819 = vmul.f32 %v1809, 1.442695
    %v1820 = vpow.pop %v1819
    %v1821 = vmul.f32 %v1810, 1.442695
    %v1822 = vpow.pop %v1821
    %v1823 = vmul.f32 %v1811, 1.442695
    %v1824 = vpow.pop %v1823
    %v1825 = vmul.f32 %v1812, 1.442695
    %v1826 = vpow.pop %v1825
    %v1827 = vmul.f32 %v1813, 1.442695
    %v1828 = vpow.pop %v1827
    %v1829 = vmul.f32 %v1814, 1.442695
    %v1830 = vpow.pop %v1829
    %v1831 = vsub.f32 %v1587, %v1799
    %v1832 = vsub.f32 %v1610, %v1800
    %v1833 = vsub.f32 %v1633, %v1801
    %v1834 = vsub.f32 %v1656, %v1802
    %v1835 = vsub.f32 %v1679, %v1803
    %v1836 = vsub.f32 %v1702, %v1804
    %v1837 = vsub.f32 %v1725, %v1805
    %v1838 = vsub.f32 %v1748, %v1806
    %v1839 = vmul.f32 %v1831, 1.442695
    %v1840 = vpow.pop %v1839
    %v1841 = vmul.f32 %v1832, 1.442695
    %v1842 = vpow.pop %v1841
    %v1843 = vmul.f32 %v1833, 1.442695
    %v1844 = vpow.pop %v1843
    %v1845 = vmul.f32 %v1834, 1.442695
    %v1846 = vpow.pop %v1845
    %v1847 = vmul.f32 %v1835, 1.442695
    %v1848 = vpow.pop %v1847
    %v1849 = vmul.f32 %v1836, 1.442695
    %v1850 = vpow.pop %v1849
    %v1851 = vmul.f32 %v1837, 1.442695
    %v1852 = vpow.pop %v1851
    %v1853 = vmul.f32 %v1838, 1.442695
    %v1854 = vpow.pop %v1853
    %v1855 = vsel %vm1357, %v1816, 0.0
    %1856 = vadd.xlane.f32.xlu0 %v1855
    %v1857 = vpop.xlane.xlu0 %1856
    %v1858 = vsel %vm1357, %v1818, 0.0
    %1859 = vadd.xlane.f32.xlu0 %v1858
    %v1860 = vpop.xlane.xlu0 %1859
    %v1861 = vsel %vm1357, %v1820, 0.0
    %1862 = vadd.xlane.f32.xlu0 %v1861
    %v1863 = vpop.xlane.xlu0 %1862
    %v1864 = vsel %vm1357, %v1822, 0.0
    %1865 = vadd.xlane.f32.xlu0 %v1864
    %v1866 = vpop.xlane.xlu0 %1865
    %v1867 = vsel %vm1357, %v1824, 0.0
    %1868 = vadd.xlane.f32.xlu0 %v1867
    %v1869 = vpop.xlane.xlu0 %1868
    %v1870 = vsel %vm1357, %v1826, 0.0
    %1871 = vadd.xlane.f32.xlu0 %v1870
    %v1872 = vpop.xlane.xlu0 %1871
    %v1873 = vsel %vm1357, %v1828, 0.0
    %1874 = vadd.xlane.f32.xlu0 %v1873
    %v1875 = vpop.xlane.xlu0 %1874
    %v1876 = vsel %vm1357, %v1830, 0.0
    %1877 = vadd.xlane.f32.xlu0 %v1876
    %v1878 = vpop.xlane.xlu0 %1877
    %v1879 = vsel %vm1774, %v1840, 0.0
    %1880 = vadd.xlane.f32.xlu0 %v1879
    %v1881 = vpop.xlane.xlu0 %1880
    %v1882 = vsel %vm1774, %v1842, 0.0
    %1883 = vadd.xlane.f32.xlu0 %v1882
    %v1884 = vpop.xlane.xlu0 %1883
    %v1885 = vsel %vm1774, %v1844, 0.0
    %1886 = vadd.xlane.f32.xlu0 %v1885
    %v1887 = vpop.xlane.xlu0 %1886
    %v1888 = vsel %vm1774, %v1846, 0.0
    %1889 = vadd.xlane.f32.xlu0 %v1888
    %v1890 = vpop.xlane.xlu0 %1889
    %v1891 = vsel %vm1774, %v1848, 0.0
    %1892 = vadd.xlane.f32.xlu0 %v1891
    %v1893 = vpop.xlane.xlu0 %1892
    %v1894 = vsel %vm1774, %v1850, 0.0
    %1895 = vadd.xlane.f32.xlu0 %v1894
    %v1896 = vpop.xlane.xlu0 %1895
    %v1897 = vsel %vm1774, %v1852, 0.0
    %1898 = vadd.xlane.f32.xlu0 %v1897
    %v1899 = vpop.xlane.xlu0 %1898
    %v1900 = vsel %vm1774, %v1854, 0.0
    %1901 = vadd.xlane.f32.xlu0 %v1900
    %v1902 = vpop.xlane.xlu0 %1901
    %v1903 = vadd.f32 %v1857, %v1881
    %v1904 = vadd.f32 %v1860, %v1884
    %v1905 = vadd.f32 %v1863, %v1887
    %v1906 = vadd.f32 %v1866, %v1890
    %v1907 = vadd.f32 %v1869, %v1893
    %v1908 = vadd.f32 %v1872, %v1896
    %v1909 = vadd.f32 %v1875, %v1899
    %v1910 = vadd.f32 %v1878, %v1902
    %v1911 = vrcp.pop %v1903
    %v1912 = vrcp.pop %v1904
    %v1913 = vrcp.pop %v1905
    %v1914 = vrcp.pop %v1906
    %v1915 = vrcp.pop %v1907
    %v1916 = vrcp.pop %v1908
    %v1917 = vrcp.pop %v1909
    %v1918 = vrcp.pop %v1910
    %v1920 = vsel %vm1774, %v1840, 0
    %vm1922 = vcmask 1043456
    %v1924 = vsel %vm1922, %v1320, 0
    %1926 = vmatpush.msra.mxu0 0.0
    %1927 = vmatpush.msra.mxu0 0.0
    %1928 = vmatpush.msra.mxu0 0.0
    %1929 = vmatpush.msra.mxu0 0.0
    %1930 = vmatpush.msra.mxu0 0.0
    %1931 = vmatpush.msra.mxu0 0.0
    %1932 = vmatpush.msra.mxu0 0.0
    %1933 = vmatpush.msra.mxu0 0.0
    %1934 = vmatpush.msra.mxu0 0.0
    %1935 = vmatpush.msra.mxu0 0.0
    %1936 = vmatpush.msra.mxu0 0.0
    %1937 = vmatpush.msra.mxu0 0.0
    %1938 = vmatpush.msra.mxu0 0.0
    %1939 = vmatpush.msra.mxu0 0.0
    %1940 = vmatpush.msra.mxu0 0.0
    %1941 = vmatpush.msra.mxu0 %v1924
    %1942 = vmatmul.f32.gmra.mxu0 %v1920
    %v1943 = vpop.f32.mrf.mxu0
    %v1944 = vadd.f32 0.0, %v1943
    %1945 = vdwg.mxu0
    %v1947 = vsel %vm1774, %v1842, 0
    %v1950 = vsel %vm1922, %v1326, 0
    %1952 = vmatpush.msra.mxu0 0.0
    %1953 = vmatpush.msra.mxu0 0.0
    %1954 = vmatpush.msra.mxu0 0.0
    %1955 = vmatpush.msra.mxu0 0.0
    %1956 = vmatpush.msra.mxu0 0.0
    %1957 = vmatpush.msra.mxu0 0.0
    %1958 = vmatpush.msra.mxu0 0.0
    %1959 = vmatpush.msra.mxu0 0.0
    %1960 = vmatpush.msra.mxu0 0.0
    %1961 = vmatpush.msra.mxu0 0.0
    %1962 = vmatpush.msra.mxu0 0.0
    %1963 = vmatpush.msra.mxu0 0.0
    %1964 = vmatpush.msra.mxu0 0.0
    %1965 = vmatpush.msra.mxu0 0.0
    %1966 = vmatpush.msra.mxu0 0.0
    %1967 = vmatpush.msra.mxu0 %v1950
    %1968 = vmatmul.f32.gmra.mxu0 %v1947
    %v1969 = vpop.f32.mrf.mxu0
    %v1970 = vadd.f32 0.0, %v1969
    %1971 = vdwg.mxu0
    %v1973 = vsel %vm1774, %v1844, 0
    %v1976 = vsel %vm1922, %v1324, 0
    %1978 = vmatpush.msra.mxu0 0.0
    %1979 = vmatpush.msra.mxu0 0.0
    %1980 = vmatpush.msra.mxu0 0.0
    %1981 = vmatpush.msra.mxu0 0.0
    %1982 = vmatpush.msra.mxu0 0.0
    %1983 = vmatpush.msra.mxu0 0.0
    %1984 = vmatpush.msra.mxu0 0.0
    %1985 = vmatpush.msra.mxu0 0.0
    %1986 = vmatpush.msra.mxu0 0.0
    %1987 = vmatpush.msra.mxu0 0.0
    %1988 = vmatpush.msra.mxu0 0.0
    %1989 = vmatpush.msra.mxu0 0.0
    %1990 = vmatpush.msra.mxu0 0.0
    %1991 = vmatpush.msra.mxu0 0.0
    %1992 = vmatpush.msra.mxu0 0.0
    %1993 = vmatpush.msra.mxu0 %v1976
    %1994 = vmatmul.f32.gmra.mxu0 %v1973
    %v1995 = vpop.f32.mrf.mxu0
    %v1996 = vadd.f32 0.0, %v1995
    %1997 = vdwg.mxu0
    %v1999 = vsel %vm1774, %v1846, 0
    %v2002 = vsel %vm1922, %v1328, 0
    %2004 = vmatpush.msra.mxu0 0.0
    %2005 = vmatpush.msra.mxu0 0.0
    %2006 = vmatpush.msra.mxu0 0.0
    %2007 = vmatpush.msra.mxu0 0.0
    %2008 = vmatpush.msra.mxu0 0.0
    %2009 = vmatpush.msra.mxu0 0.0
    %2010 = vmatpush.msra.mxu0 0.0
    %2011 = vmatpush.msra.mxu0 0.0
    %2012 = vmatpush.msra.mxu0 0.0
    %2013 = vmatpush.msra.mxu0 0.0
    %2014 = vmatpush.msra.mxu0 0.0
    %2015 = vmatpush.msra.mxu0 0.0
    %2016 = vmatpush.msra.mxu0 0.0
    %2017 = vmatpush.msra.mxu0 0.0
    %2018 = vmatpush.msra.mxu0 0.0
    %2019 = vmatpush.msra.mxu0 %v2002
    %2020 = vmatmul.f32.gmra.mxu0 %v1999
    %v2021 = vpop.f32.mrf.mxu0
    %v2022 = vadd.f32 0.0, %v2021
    %2023 = vdwg.mxu0
    %v2025 = vsel %vm1774, %v1848, 0
    %v2028 = vsel %vm1922, %v1348, 0
    %2030 = vmatpush.msra.mxu0 0.0
    %2031 = vmatpush.msra.mxu0 0.0
    %2032 = vmatpush.msra.mxu0 0.0
    %2033 = vmatpush.msra.mxu0 0.0
    %2034 = vmatpush.msra.mxu0 0.0
    %2035 = vmatpush.msra.mxu0 0.0
    %2036 = vmatpush.msra.mxu0 0.0
    %2037 = vmatpush.msra.mxu0 0.0
    %2038 = vmatpush.msra.mxu0 0.0
    %2039 = vmatpush.msra.mxu0 0.0
    %2040 = vmatpush.msra.mxu0 0.0
    %2041 = vmatpush.msra.mxu0 0.0
    %2042 = vmatpush.msra.mxu0 0.0
    %2043 = vmatpush.msra.mxu0 0.0
    %2044 = vmatpush.msra.mxu0 0.0
    %2045 = vmatpush.msra.mxu0 %v2028
    %2046 = vmatmul.f32.gmra.mxu0 %v2025
    %v2047 = vpop.f32.mrf.mxu0
    %v2048 = vadd.f32 0.0, %v2047
    %2049 = vdwg.mxu0
    %v2051 = vsel %vm1774, %v1850, 0
    %v2054 = vsel %vm1922, %v1354, 0
    %2056 = vmatpush.msra.mxu0 0.0
    %2057 = vmatpush.msra.mxu0 0.0
    %2058 = vmatpush.msra.mxu0 0.0
    %2059 = vmatpush.msra.mxu0 0.0
    %2060 = vmatpush.msra.mxu0 0.0
    %2061 = vmatpush.msra.mxu0 0.0
    %2062 = vmatpush.msra.mxu0 0.0
    %2063 = vmatpush.msra.mxu0 0.0
    %2064 = vmatpush.msra.mxu0 0.0
    %2065 = vmatpush.msra.mxu0 0.0
    %2066 = vmatpush.msra.mxu0 0.0
    %2067 = vmatpush.msra.mxu0 0.0
    %2068 = vmatpush.msra.mxu0 0.0
    %2069 = vmatpush.msra.mxu0 0.0
    %2070 = vmatpush.msra.mxu0 0.0
    %2071 = vmatpush.msra.mxu0 %v2054
    %2072 = vmatmul.f32.gmra.mxu0 %v2051
    %v2073 = vpop.f32.mrf.mxu0
    %v2074 = vadd.f32 0.0, %v2073
    %2075 = vdwg.mxu0
    %v2077 = vsel %vm1774, %v1852, 0
    %v2080 = vsel %vm1922, %v1352, 0
    %2082 = vmatpush.msra.mxu0 0.0
    %2083 = vmatpush.msra.mxu0 0.0
    %2084 = vmatpush.msra.mxu0 0.0
    %2085 = vmatpush.msra.mxu0 0.0
    %2086 = vmatpush.msra.mxu0 0.0
    %2087 = vmatpush.msra.mxu0 0.0
    %2088 = vmatpush.msra.mxu0 0.0
    %2089 = vmatpush.msra.mxu0 0.0
    %2090 = vmatpush.msra.mxu0 0.0
    %2091 = vmatpush.msra.mxu0 0.0
    %2092 = vmatpush.msra.mxu0 0.0
    %2093 = vmatpush.msra.mxu0 0.0
    %2094 = vmatpush.msra.mxu0 0.0
    %2095 = vmatpush.msra.mxu0 0.0
    %2096 = vmatpush.msra.mxu0 0.0
    %2097 = vmatpush.msra.mxu0 %v2080
    %2098 = vmatmul.f32.gmra.mxu0 %v2077
    %v2099 = vpop.f32.mrf.mxu0
    %v2100 = vadd.f32 0.0, %v2099
    %2101 = vdwg.mxu0
    %v2103 = vsel %vm1774, %v1854, 0
    %v2106 = vsel %vm1922, %v1356, 0
    %2108 = vmatpush.msra.mxu0 0.0
    %2109 = vmatpush.msra.mxu0 0.0
    %2110 = vmatpush.msra.mxu0 0.0
    %2111 = vmatpush.msra.mxu0 0.0
    %2112 = vmatpush.msra.mxu0 0.0
    %2113 = vmatpush.msra.mxu0 0.0
    %2114 = vmatpush.msra.mxu0 0.0
    %2115 = vmatpush.msra.mxu0 0.0
    %2116 = vmatpush.msra.mxu0 0.0
    %2117 = vmatpush.msra.mxu0 0.0
    %2118 = vmatpush.msra.mxu0 0.0
    %2119 = vmatpush.msra.mxu0 0.0
    %2120 = vmatpush.msra.mxu0 0.0
    %2121 = vmatpush.msra.mxu0 0.0
    %2122 = vmatpush.msra.mxu0 0.0
    %2123 = vmatpush.msra.mxu0 %v2106
    %2124 = vmatmul.f32.gmra.mxu0 %v2103
    %v2125 = vpop.f32.mrf.mxu0
    %v2126 = vadd.f32 0.0, %v2125
    %2127 = vdwg.mxu0
    %v2129 = vsel %vm1357, %v1816, 0
    %2131 = vmatpush.msra.mxu0 0.0
    %2132 = vmatpush.msra.mxu0 0.0
    %2133 = vmatpush.msra.mxu0 0.0
    %2134 = vmatpush.msra.mxu0 0.0
    %2135 = vmatpush.msra.mxu0 0.0
    %2136 = vmatpush.msra.mxu0 0.0
    %2137 = vmatpush.msra.mxu0 0.0
    %2138 = vmatpush.msra.mxu0 0.0
    %2139 = vmatpush.msra.mxu0 0.0
    %2140 = vmatpush.msra.mxu0 0.0
    %2141 = vmatpush.msra.mxu0 0.0
    %2142 = vmatpush.msra.mxu0 0.0
    %2143 = vmatpush.msra.mxu0 0.0
    %2144 = vmatpush.msra.mxu0 0.0
    %2145 = vmatpush.msra.mxu0 0.0
    %2146 = vmatpush.msra.mxu0 %v1054
    %2147 = vmatmul.f32.gmra.mxu0 %v2129
    %v2148 = vpop.f32.mrf.mxu0
    %v2149 = vadd.f32 %v1944, %v2148
    %2150 = vdwg.mxu0
    %v2152 = vsel %vm1357, %v1818, 0
    %2154 = vmatpush.msra.mxu0 0.0
    %2155 = vmatpush.msra.mxu0 0.0
    %2156 = vmatpush.msra.mxu0 0.0
    %2157 = vmatpush.msra.mxu0 0.0
    %2158 = vmatpush.msra.mxu0 0.0
    %2159 = vmatpush.msra.mxu0 0.0
    %2160 = vmatpush.msra.mxu0 0.0
    %2161 = vmatpush.msra.mxu0 0.0
    %2162 = vmatpush.msra.mxu0 0.0
    %2163 = vmatpush.msra.mxu0 0.0
    %2164 = vmatpush.msra.mxu0 0.0
    %2165 = vmatpush.msra.mxu0 0.0
    %2166 = vmatpush.msra.mxu0 0.0
    %2167 = vmatpush.msra.mxu0 0.0
    %2168 = vmatpush.msra.mxu0 0.0
    %2169 = vmatpush.msra.mxu0 %v1056
    %2170 = vmatmul.f32.gmra.mxu0 %v2152
    %v2171 = vpop.f32.mrf.mxu0
    %v2172 = vadd.f32 %v1970, %v2171
    %2173 = vdwg.mxu0
    %v2175 = vsel %vm1357, %v1820, 0
    %2177 = vmatpush.msra.mxu0 0.0
    %2178 = vmatpush.msra.mxu0 0.0
    %2179 = vmatpush.msra.mxu0 0.0
    %2180 = vmatpush.msra.mxu0 0.0
    %2181 = vmatpush.msra.mxu0 0.0
    %2182 = vmatpush.msra.mxu0 0.0
    %2183 = vmatpush.msra.mxu0 0.0
    %2184 = vmatpush.msra.mxu0 0.0
    %2185 = vmatpush.msra.mxu0 0.0
    %2186 = vmatpush.msra.mxu0 0.0
    %2187 = vmatpush.msra.mxu0 0.0
    %2188 = vmatpush.msra.mxu0 0.0
    %2189 = vmatpush.msra.mxu0 0.0
    %2190 = vmatpush.msra.mxu0 0.0
    %2191 = vmatpush.msra.mxu0 0.0
    %2192 = vmatpush.msra.mxu0 %v1058
    %2193 = vmatmul.f32.gmra.mxu0 %v2175
    %v2194 = vpop.f32.mrf.mxu0
    %v2195 = vadd.f32 %v1996, %v2194
    %2196 = vdwg.mxu0
    %v2198 = vsel %vm1357, %v1822, 0
    %2200 = vmatpush.msra.mxu0 0.0
    %2201 = vmatpush.msra.mxu0 0.0
    %2202 = vmatpush.msra.mxu0 0.0
    %2203 = vmatpush.msra.mxu0 0.0
    %2204 = vmatpush.msra.mxu0 0.0
    %2205 = vmatpush.msra.mxu0 0.0
    %2206 = vmatpush.msra.mxu0 0.0
    %2207 = vmatpush.msra.mxu0 0.0
    %2208 = vmatpush.msra.mxu0 0.0
    %2209 = vmatpush.msra.mxu0 0.0
    %2210 = vmatpush.msra.mxu0 0.0
    %2211 = vmatpush.msra.mxu0 0.0
    %2212 = vmatpush.msra.mxu0 0.0
    %2213 = vmatpush.msra.mxu0 0.0
    %2214 = vmatpush.msra.mxu0 0.0
    %2215 = vmatpush.msra.mxu0 %v1060
    %2216 = vmatmul.f32.gmra.mxu0 %v2198
    %v2217 = vpop.f32.mrf.mxu0
    %v2218 = vadd.f32 %v2022, %v2217
    %2219 = vdwg.mxu0
    %v2221 = vsel %vm1357, %v1824, 0
    %2223 = vmatpush.msra.mxu0 0.0
    %2224 = vmatpush.msra.mxu0 0.0
    %2225 = vmatpush.msra.mxu0 0.0
    %2226 = vmatpush.msra.mxu0 0.0
    %2227 = vmatpush.msra.mxu0 0.0
    %2228 = vmatpush.msra.mxu0 0.0
    %2229 = vmatpush.msra.mxu0 0.0
    %2230 = vmatpush.msra.mxu0 0.0
    %2231 = vmatpush.msra.mxu0 0.0
    %2232 = vmatpush.msra.mxu0 0.0
    %2233 = vmatpush.msra.mxu0 0.0
    %2234 = vmatpush.msra.mxu0 0.0
    %2235 = vmatpush.msra.mxu0 0.0
    %2236 = vmatpush.msra.mxu0 0.0
    %2237 = vmatpush.msra.mxu0 0.0
    %2238 = vmatpush.msra.mxu0 %v1110
    %2239 = vmatmul.f32.gmra.mxu0 %v2221
    %v2240 = vpop.f32.mrf.mxu0
    %v2241 = vadd.f32 %v2048, %v2240
    %2242 = vdwg.mxu0
    %v2244 = vsel %vm1357, %v1826, 0
    %2246 = vmatpush.msra.mxu0 0.0
    %2247 = vmatpush.msra.mxu0 0.0
    %2248 = vmatpush.msra.mxu0 0.0
    %2249 = vmatpush.msra.mxu0 0.0
    %2250 = vmatpush.msra.mxu0 0.0
    %2251 = vmatpush.msra.mxu0 0.0
    %2252 = vmatpush.msra.mxu0 0.0
    %2253 = vmatpush.msra.mxu0 0.0
    %2254 = vmatpush.msra.mxu0 0.0
    %2255 = vmatpush.msra.mxu0 0.0
    %2256 = vmatpush.msra.mxu0 0.0
    %2257 = vmatpush.msra.mxu0 0.0
    %2258 = vmatpush.msra.mxu0 0.0
    %2259 = vmatpush.msra.mxu0 0.0
    %2260 = vmatpush.msra.mxu0 0.0
    %2261 = vmatpush.msra.mxu0 %v1112
    %2262 = vmatmul.f32.gmra.mxu0 %v2244
    %v2263 = vpop.f32.mrf.mxu0
    %v2264 = vadd.f32 %v2074, %v2263
    %2265 = vdwg.mxu0
    %v2267 = vsel %vm1357, %v1828, 0
    %2269 = vmatpush.msra.mxu0 0.0
    %2270 = vmatpush.msra.mxu0 0.0
    %2271 = vmatpush.msra.mxu0 0.0
    %2272 = vmatpush.msra.mxu0 0.0
    %2273 = vmatpush.msra.mxu0 0.0
    %2274 = vmatpush.msra.mxu0 0.0
    %2275 = vmatpush.msra.mxu0 0.0
    %2276 = vmatpush.msra.mxu0 0.0
    %2277 = vmatpush.msra.mxu0 0.0
    %2278 = vmatpush.msra.mxu0 0.0
    %2279 = vmatpush.msra.mxu0 0.0
    %2280 = vmatpush.msra.mxu0 0.0
    %2281 = vmatpush.msra.mxu0 0.0
    %2282 = vmatpush.msra.mxu0 0.0
    %2283 = vmatpush.msra.mxu0 0.0
    %2284 = vmatpush.msra.mxu0 %v1114
    %2285 = vmatmul.f32.gmra.mxu0 %v2267
    %v2286 = vpop.f32.mrf.mxu0
    %v2287 = vadd.f32 %v2100, %v2286
    %2288 = vdwg.mxu0
    %v2290 = vsel %vm1357, %v1830, 0
    %2292 = vmatpush.msra.mxu0 0.0
    %2293 = vmatpush.msra.mxu0 0.0
    %2294 = vmatpush.msra.mxu0 0.0
    %2295 = vmatpush.msra.mxu0 0.0
    %2296 = vmatpush.msra.mxu0 0.0
    %2297 = vmatpush.msra.mxu0 0.0
    %2298 = vmatpush.msra.mxu0 0.0
    %2299 = vmatpush.msra.mxu0 0.0
    %2300 = vmatpush.msra.mxu0 0.0
    %2301 = vmatpush.msra.mxu0 0.0
    %2302 = vmatpush.msra.mxu0 0.0
    %2303 = vmatpush.msra.mxu0 0.0
    %2304 = vmatpush.msra.mxu0 0.0
    %2305 = vmatpush.msra.mxu0 0.0
    %2306 = vmatpush.msra.mxu0 0.0
    %2307 = vmatpush.msra.mxu0 %v1116
    %2308 = vmatmul.f32.gmra.mxu0 %v2290
    %v2309 = vpop.f32.mrf.mxu0
    %v2310 = vadd.f32 %v2126, %v2309
    %2311 = vdwg.mxu0
    %v2312 = vmul.f32 %v2149, %v1911
    %v2313 = vmul.f32 %v2172, %v1912
    %v2314 = vmul.f32 %v2195, %v1913
    %v2315 = vmul.f32 %v2218, %v1914
    %v2316 = vmul.f32 %v2241, %v1915
    %v2317 = vmul.f32 %v2264, %v1916
    %v2318 = vmul.f32 %v2287, %v1917
    %v2319 = vmul.f32 %v2310, %v1918
    %v2320 = vrot.slane %v2314, 4
    %v2321 = vsel %vm399, %v2320, %v2312
    %v2322 = vrot.slane %v2312, 4
    %v2323 = vsel %vm399, %v2314, %v2322
    %v2325 = vunpack.c.l.s4 1983009808
    %v2326 = vunpack.c.0.s8 %v2325
    %v2327 = vperm.slane %v2321, %v2326
    %v2329 = vunpack.c.l.s4 1983009808
    %v2330 = vunpack.c.0.s8 %v2329
    %v2331 = vperm.slane %v2323, %v2330
    %v2332 = vrot.slane %v2315, 4
    %v2333 = vsel %vm399, %v2332, %v2313
    %v2334 = vrot.slane %v2313, 4
    %v2335 = vsel %vm399, %v2315, %v2334
    %v2337 = vunpack.c.l.s4 1983009808
    %v2338 = vunpack.c.0.s8 %v2337
    %v2339 = vperm.slane %v2333, %v2338
    %v2341 = vunpack.c.l.s4 1983009808
    %v2342 = vunpack.c.0.s8 %v2341
    %v2343 = vperm.slane %v2335, %v2342
    %v2344 = vrot.slane %v2339, 4
    %v2345 = vsel %vm399, %v2344, %v2327
    %v2346 = vrot.slane %v2327, 4
    %v2347 = vsel %vm399, %v2339, %v2346
    %v2349 = vunpack.c.l.s4 1934713408
    %v2350 = vunpack.c.0.s8 %v2349
    %v2351 = vperm.slane %v2345, %v2350
    %v2353 = vunpack.c.l.s4 1934713408
    %v2354 = vunpack.c.0.s8 %v2353
    %v2355 = vperm.slane %v2347, %v2354
    %v2356 = vrot.slane %v2343, 4
    %v2357 = vsel %vm399, %v2356, %v2331
    %v2358 = vrot.slane %v2331, 4
    %v2359 = vsel %vm399, %v2343, %v2358
    %v2361 = vunpack.c.l.s4 1934713408
    %v2362 = vunpack.c.0.s8 %v2361
    %v2363 = vperm.slane %v2357, %v2362
    %v2365 = vunpack.c.l.s4 1934713408
    %v2366 = vunpack.c.0.s8 %v2365
    %v2367 = vperm.slane %v2359, %v2366
    %v2368 = vrot.slane %v2351, 4
    %v2369 = vsel %vm399, 0.0, %v2368
    %v2370 = vrot.slane %v2355, 4
    %v2371 = vsel %vm399, 0.0, %v2370
    %v2372 = vrot.slane %v2363, 4
    %v2373 = vsel %vm399, 0.0, %v2372
    %v2374 = vrot.slane %v2367, 4
    %v2375 = vsel %vm399, 0.0, %v2374
    %v2376 = vrot.slane %v2318, 4
    %v2377 = vsel %vm399, %v2376, %v2316
    %v2378 = vrot.slane %v2316, 4
    %v2379 = vsel %vm399, %v2318, %v2378
    %v2381 = vunpack.c.l.s4 1983009808
    %v2382 = vunpack.c.0.s8 %v2381
    %v2383 = vperm.slane %v2377, %v2382
    %v2385 = vunpack.c.l.s4 1983009808
    %v2386 = vunpack.c.0.s8 %v2385
    %v2387 = vperm.slane %v2379, %v2386
    %v2388 = vrot.slane %v2319, 4
    %v2389 = vsel %vm399, %v2388, %v2317
    %v2390 = vrot.slane %v2317, 4
    %v2391 = vsel %vm399, %v2319, %v2390
    %v2393 = vunpack.c.l.s4 1983009808
    %v2394 = vunpack.c.0.s8 %v2393
    %v2395 = vperm.slane %v2389, %v2394
    %v2397 = vunpack.c.l.s4 1983009808
    %v2398 = vunpack.c.0.s8 %v2397
    %v2399 = vperm.slane %v2391, %v2398
    %v2400 = vrot.slane %v2395, 4
    %v2401 = vsel %vm399, %v2400, %v2383
    %v2402 = vrot.slane %v2383, 4
    %v2403 = vsel %vm399, %v2395, %v2402
    %v2405 = vunpack.c.l.s4 1934713408
    %v2406 = vunpack.c.0.s8 %v2405
    %v2407 = vperm.slane %v2401, %v2406
    %v2409 = vunpack.c.l.s4 1934713408
    %v2410 = vunpack.c.0.s8 %v2409
    %v2411 = vperm.slane %v2403, %v2410
    %v2412 = vrot.slane %v2399, 4
    %v2413 = vsel %vm399, %v2412, %v2387
    %v2414 = vrot.slane %v2387, 4
    %v2415 = vsel %vm399, %v2399, %v2414
    %v2417 = vunpack.c.l.s4 1934713408
    %v2418 = vunpack.c.0.s8 %v2417
    %v2419 = vperm.slane %v2413, %v2418
    %v2421 = vunpack.c.l.s4 1934713408
    %v2422 = vunpack.c.0.s8 %v2421
    %v2423 = vperm.slane %v2415, %v2422
    %v2424 = vrot.slane %v2407, 4
    %v2425 = vsel %vm399, 0.0, %v2424
    %v2426 = vrot.slane %v2411, 4
    %v2427 = vsel %vm399, 0.0, %v2426
    %v2428 = vrot.slane %v2419, 4
    %v2429 = vsel %vm399, 0.0, %v2428
    %v2430 = vrot.slane %v2423, 4
    %v2431 = vsel %vm399, 0.0, %v2430
    %v2432 = vrot.slane %v2369, 4
    %v2433 = vsel %vm399, %v2432, %v2351
    %v2435 = vunpack.c.l.s4 1983009808
    %v2436 = vunpack.c.0.s8 %v2435
    %v2437 = vperm.slane %v2433, %v2436
    %v2438 = vrot.slane %v2425, 4
    %v2439 = vsel %vm399, %v2438, %v2407
    %v2441 = vunpack.c.l.s4 1983009808
    %v2442 = vunpack.c.0.s8 %v2441
    %v2443 = vperm.slane %v2439, %v2442
    %v2444 = vrot.slane %v2371, 4
    %v2445 = vsel %vm399, %v2444, %v2355
    %v2447 = vunpack.c.l.s4 1983009808
    %v2448 = vunpack.c.0.s8 %v2447
    %v2449 = vperm.slane %v2445, %v2448
    %v2450 = vrot.slane %v2427, 4
    %v2451 = vsel %vm399, %v2450, %v2411
    %v2453 = vunpack.c.l.s4 1983009808
    %v2454 = vunpack.c.0.s8 %v2453
    %v2455 = vperm.slane %v2451, %v2454
    %v2456 = vrot.slane %v2443, 4
    %v2457 = vsel %vm399, %v2456, %v2437
    %v2458 = vrot.slane %v2437, 4
    %v2459 = vsel %vm399, %v2443, %v2458
    %v2461 = vunpack.c.l.s4 1934713408
    %v2462 = vunpack.c.0.s8 %v2461
    %v2463 = vperm.slane %v2457, %v2462
    %v2465 = vunpack.c.l.s4 1934713408
    %v2466 = vunpack.c.0.s8 %v2465
    %v2467 = vperm.slane %v2459, %v2466
    %v2468 = vrot.slane %v2455, 4
    %v2469 = vsel %vm399, %v2468, %v2449
    %v2470 = vrot.slane %v2449, 4
    %v2471 = vsel %vm399, %v2455, %v2470
    %v2473 = vunpack.c.l.s4 1934713408
    %v2474 = vunpack.c.0.s8 %v2473
    %v2475 = vperm.slane %v2469, %v2474
    %v2477 = vunpack.c.l.s4 1934713408
    %v2478 = vunpack.c.0.s8 %v2477
    %v2479 = vperm.slane %v2471, %v2478
    %v2480 = vrot.slane %v2475, 4
    %v2481 = vsel %vm399, %v2480, %v2463
    %v2482 = vrot.slane %v2463, 4
    %v2483 = vsel %vm399, %v2475, %v2482
    %v2484 = vrot.slane %v2479, 4
    %v2485 = vsel %vm399, %v2484, %v2467
    %v2486 = vrot.slane %v2467, 4
    %v2487 = vsel %vm399, %v2479, %v2486
    %v2488 = vrot.slane %v2373, 4
    %v2489 = vsel %vm399, %v2488, %v2363
    %v2491 = vunpack.c.l.s4 1983009808
    %v2492 = vunpack.c.0.s8 %v2491
    %v2493 = vperm.slane %v2489, %v2492
    %v2494 = vrot.slane %v2429, 4
    %v2495 = vsel %vm399, %v2494, %v2419
    %v2497 = vunpack.c.l.s4 1983009808
    %v2498 = vunpack.c.0.s8 %v2497
    %v2499 = vperm.slane %v2495, %v2498
    %v2500 = vrot.slane %v2375, 4
    %v2501 = vsel %vm399, %v2500, %v2367
    %v2503 = vunpack.c.l.s4 1983009808
    %v2504 = vunpack.c.0.s8 %v2503
    %v2505 = vperm.slane %v2501, %v2504
    %v2506 = vrot.slane %v2431, 4
    %v2507 = vsel %vm399, %v2506, %v2423
    %v2509 = vunpack.c.l.s4 1983009808
    %v2510 = vunpack.c.0.s8 %v2509
    %v2511 = vperm.slane %v2507, %v2510
    %v2512 = vrot.slane %v2499, 4
    %v2513 = vsel %vm399, %v2512, %v2493
    %v2514 = vrot.slane %v2493, 4
    %v2515 = vsel %vm399, %v2499, %v2514
    %v2517 = vunpack.c.l.s4 1934713408
    %v2518 = vunpack.c.0.s8 %v2517
    %v2519 = vperm.slane %v2513, %v2518
    %v2521 = vunpack.c.l.s4 1934713408
    %v2522 = vunpack.c.0.s8 %v2521
    %v2523 = vperm.slane %v2515, %v2522
    %v2524 = vrot.slane %v2511, 4
    %v2525 = vsel %vm399, %v2524, %v2505
    %v2526 = vrot.slane %v2505, 4
    %v2527 = vsel %vm399, %v2511, %v2526
    %v2529 = vunpack.c.l.s4 1934713408
    %v2530 = vunpack.c.0.s8 %v2529
    %v2531 = vperm.slane %v2525, %v2530
    %v2533 = vunpack.c.l.s4 1934713408
    %v2534 = vunpack.c.0.s8 %v2533
    %v2535 = vperm.slane %v2527, %v2534
    %v2536 = vrot.slane %v2531, 4
    %v2537 = vsel %vm399, %v2536, %v2519
    %v2538 = vrot.slane %v2519, 4
    %v2539 = vsel %vm399, %v2531, %v2538
    %v2540 = vrot.slane %v2535, 4
    %v2541 = vsel %vm399, %v2540, %v2523
    %v2542 = vrot.slane %v2523, 4
    %v2543 = vsel %vm399, %v2535, %v2542
    %2546 = vrot.lane.b32.xlu0 %v2483, 8
    %v2547 = vpop.permute.xlu0 %2546
    %2548 = vrot.lane.b32.xlu0 %v2539, 8
    %v2549 = vpop.permute.xlu0 %2548
    %2554 = vrot.lane.b32.xlu0 %v2485, 16
    %v2555 = vpop.permute.xlu0 %2554
    %2556 = vrot.lane.b32.xlu0 %v2541, 16
    %v2557 = vpop.permute.xlu0 %2556
    %2562 = vrot.lane.b32.xlu0 %v2487, 24
    %v2563 = vpop.permute.xlu0 %2562
    %2564 = vrot.lane.b32.xlu0 %v2543, 24
    %v2565 = vpop.permute.xlu0 %2564
    %v2568 = vsel %vm1357, %v2481, %v2547
    %v2569 = vsel %vm1357, %v2537, %v2549
    %vm2570 = vcmask 130048
    %v2571 = vsel %vm2570, %v2568, %v2555
    %v2572 = vsel %vm2570, %v2569, %v2557
    %vm2573 = vcmask 195584
    %v2574 = vsel %vm2573, %v2571, %v2563
    %v2575 = vsel %vm2573, %v2572, %v2565
    %v2576 = vld [vmem:[#allocation13] sm:$0xff]
    %v2577 = vld [vmem:[#allocation13 + $0x8] sm:$0xff]
    %v2578 = vld [vmem:[#allocation13 + $0x10] sm:$0xff]
    %v2579 = vld [vmem:[#allocation13 + $0x18] sm:$0xff]
    %v2580 = vld [vmem:[%s9] sm:$0x1]
    %v2582 = vperm.slane %v2580, 0
    %v2585 = vsel %vm212, %v2574, 0
    %v2588 = vsel %vm212, %v2575, 0
    %2590 = vmatpush.msra.mxu0 0.0
    %2591 = vmatpush.msra.mxu0 0.0
    %2592 = vmatpush.msra.mxu0 0.0
    %2593 = vmatpush.msra.mxu0 0.0
    %2594 = vmatpush.msra.mxu0 0.0
    %2595 = vmatpush.msra.mxu0 0.0
    %2596 = vmatpush.msra.mxu0 0.0
    %2597 = vmatpush.msra.mxu0 0.0
    %2598 = vmatpush.msra.mxu0 0.0
    %2599 = vmatpush.msra.mxu0 0.0
    %2600 = vmatpush.msra.mxu0 0.0
    %2601 = vmatpush.msra.mxu0 0.0
    %2602 = vmatpush.msra.mxu0 %v2579
    %2603 = vmatpush.msra.mxu0 %v2578
    %2604 = vmatpush.msra.mxu0 %v2577
    %2605 = vmatpush.msra.mxu0 %v2576
    %2606 = vmatmul.f32.gmra.mxu0 %v2585
    %v2607 = vpop.f32.mrf.mxu0
    %v2608 = vadd.f32 %v2582, %v2607
    %2609 = vmatmul.f32.gmra.mxu0 %v2588
    %v2610 = vpop.f32.mrf.mxu0
    %v2611 = vadd.f32 %v2582, %v2610
    %2612 = vdwg.mxu0
    %v2615 = vrot.slane %v2608, 2
    %v2616 = vrot.slane %v2608, 4
    %v2617 = vrot.slane %v2608, 6
    %v2618 = vrot.slane %v2611, 2
    %v2619 = vrot.slane %v2611, 4
    %v2620 = vrot.slane %v2611, 6
    %v2627 = vadd.f32 %v151, %v2608
    %v2628 = vadd.f32 %v152, %v2615
    %v2629 = vadd.f32 %v153, %v2616
    %v2630 = vadd.f32 %v154, %v2617
    %v2631 = vadd.f32 %v155, %v2611
    %v2632 = vadd.f32 %v156, %v2618
    %v2633 = vadd.f32 %v157, %v2619
    %v2634 = vadd.f32 %v158, %v2620
    %2643 = vst [vmem:[#allocation1] ss:$4 sm:$0xff] %v2627
    %s2644 = scalar_lea.vmem [#allocation1], 1
    %2645 = vst [vmem:[%s2644] ss:$4 sm:$0xff] %v2628
    %s2646 = scalar_lea.vmem [#allocation1], 2
    %2647 = vst [vmem:[%s2646] ss:$4 sm:$0xff] %v2629
    %s2648 = scalar_lea.vmem [#allocation1], 3
    %2649 = vst [vmem:[%s2648] ss:$4 sm:$0xff] %v2630
    %s2650 = scalar_lea.vmem [#allocation1], 32
    %2651 = vst [vmem:[%s2650] ss:$4 sm:$0xff] %v2631
    %s2652 = scalar_lea.vmem [#allocation1], 33
    %2653 = vst [vmem:[%s2652] ss:$4 sm:$0xff] %v2632
    %s2654 = scalar_lea.vmem [#allocation1], 34
    %2655 = vst [vmem:[%s2654] ss:$4 sm:$0xff] %v2633
    %s2656 = scalar_lea.vmem [#allocation1], 35
    %2657 = vst [vmem:[%s2656] ss:$4 sm:$0xff] %v2634
    %v2658 = vld.sshfl [vmem:[#allocation1] sm:$0xff pattern:$0x73625140]
    %v2659 = vld.sshfl [vmem:[#allocation1 + $0x20] sm:$0xff pattern:$0x73625140]
    %v2662 = vsel %vm212, %v2658, 0.0
    %2663 = vadd.xlane.f32.xlu0 %v2662
    %v2664 = vpop.xlane.xlu0 %2663
    %v2665 = vsel %vm212, %v2659, 0.0
    %2666 = vadd.xlane.f32.xlu0 %v2665
    %v2667 = vpop.xlane.xlu0 %2666
    %v2668 = vrcp.pop 32.0
    %v2669 = vmul.f32 32.0, %v2668
    %v2670 = vsub.f32 1.0, %v2669
    %v2671 = vmul.f32 %v2668, %v2670
    %v2672 = vadd.f32 %v2668, %v2671
    %vm2673 = vweird.f32 %v2668
    %v2674 = vsel %vm2673, %v2668, %v2672
    %v2675 = vmul.f32 %v2664, %v2674
    %v2676 = vmul.f32 %v2667, %v2674
    %v2680 = vunpack.c.l.s4 269488144
    %v2681 = vunpack.c.0.s8 %v2680
    %v2682 = vperm.slane %v2675, %v2681
    %v2684 = vunpack.c.l.s4 842150450
    %v2685 = vunpack.c.0.s8 %v2684
    %v2686 = vperm.slane %v2675, %v2685
    %v2688 = vunpack.c.l.s4 1414812756
    %v2689 = vunpack.c.0.s8 %v2688
    %v2690 = vperm.slane %v2675, %v2689
    %v2692 = vunpack.c.l.s4 1987475062
    %v2693 = vunpack.c.0.s8 %v2692
    %v2694 = vperm.slane %v2675, %v2693
    %v2696 = vunpack.c.l.s4 269488144
    %v2697 = vunpack.c.0.s8 %v2696
    %v2698 = vperm.slane %v2676, %v2697
    %v2700 = vunpack.c.l.s4 842150450
    %v2701 = vunpack.c.0.s8 %v2700
    %v2702 = vperm.slane %v2676, %v2701
    %v2704 = vunpack.c.l.s4 1414812756
    %v2705 = vunpack.c.0.s8 %v2704
    %v2706 = vperm.slane %v2676, %v2705
    %v2708 = vunpack.c.l.s4 1987475062
    %v2709 = vunpack.c.0.s8 %v2708
    %v2710 = vperm.slane %v2676, %v2709
    %v2719 = vsub.f32 %v2627, %v2682
    %v2720 = vsub.f32 %v2628, %v2686
    %v2721 = vsub.f32 %v2629, %v2690
    %v2722 = vsub.f32 %v2630, %v2694
    %v2723 = vsub.f32 %v2631, %v2698
    %v2724 = vsub.f32 %v2632, %v2702
    %v2725 = vsub.f32 %v2633, %v2706
    %v2726 = vsub.f32 %v2634, %v2710
    %v2727 = vmul.f32 %v2719, %v2719
    %v2728 = vmul.f32 %v2720, %v2720
    %v2729 = vmul.f32 %v2721, %v2721
    %v2730 = vmul.f32 %v2722, %v2722
    %v2731 = vmul.f32 %v2723, %v2723
    %v2732 = vmul.f32 %v2724, %v2724
    %v2733 = vmul.f32 %v2725, %v2725
    %v2734 = vmul.f32 %v2726, %v2726
    %2743 = vst [vmem:[#allocation1] ss:$4 sm:$0xff] %v2727
    %s2744 = scalar_lea.vmem [#allocation1], 1
    %2745 = vst [vmem:[%s2744] ss:$4 sm:$0xff] %v2728
    %s2746 = scalar_lea.vmem [#allocation1], 2
    %2747 = vst [vmem:[%s2746] ss:$4 sm:$0xff] %v2729
    %s2748 = scalar_lea.vmem [#allocation1], 3
    %2749 = vst [vmem:[%s2748] ss:$4 sm:$0xff] %v2730
    %s2750 = scalar_lea.vmem [#allocation1], 32
    %2751 = vst [vmem:[%s2750] ss:$4 sm:$0xff] %v2731
    %s2752 = scalar_lea.vmem [#allocation1], 33
    %2753 = vst [vmem:[%s2752] ss:$4 sm:$0xff] %v2732
    %s2754 = scalar_lea.vmem [#allocation1], 34
    %2755 = vst [vmem:[%s2754] ss:$4 sm:$0xff] %v2733
    %s2756 = scalar_lea.vmem [#allocation1], 35
    %2757 = vst [vmem:[%s2756] ss:$4 sm:$0xff] %v2734
    %v2758 = vld.sshfl [vmem:[#allocation1] sm:$0xff pattern:$0x73625140]
    %v2759 = vld.sshfl [vmem:[#allocation1 + $0x20] sm:$0xff pattern:$0x73625140]
    %v2762 = vsel %vm212, %v2758, 0.0
    %2763 = vadd.xlane.f32.xlu0 %v2762
    %v2764 = vpop.xlane.xlu0 %2763
    %v2765 = vsel %vm212, %v2759, 0.0
    %2766 = vadd.xlane.f32.xlu0 %v2765
    %v2767 = vpop.xlane.xlu0 %2766
    %v2768 = vmul.f32 %v2764, %v2674
    %v2769 = vmul.f32 %v2767, %v2674
    %v2770 = vadd.f32 %v2768, 1e-05
    %v2771 = vadd.f32 %v2769, 1e-05
    %v2772 = vrsqrt.pop %v2770
    %v2773 = vmul.f32 %v2772, %v2770
    %v2774 = vmul.f32 %v2773, %v2772
    %v2775 = vmul.f32 0.5, %v2774
    %v2776 = vsub.f32 1.5, %v2775
    %v2777 = vmul.f32 %v2772, %v2776
    %vm2778 = vweird.f32 %v2770
    %vm2779 = vweird.f32 %v2772
    %vm2780 = vmor %vm2778, %vm2779
    %v2781 = vsel %vm2780, %v2772, %v2777
    %v2782 = vrsqrt.pop %v2771
    %v2783 = vmul.f32 %v2782, %v2771
    %v2784 = vmul.f32 %v2783, %v2782
    %v2785 = vmul.f32 0.5, %v2784
    %v2786 = vsub.f32 1.5, %v2785
    %v2787 = vmul.f32 %v2782, %v2786
    %vm2788 = vweird.f32 %v2771
    %vm2789 = vweird.f32 %v2782
    %vm2790 = vmor %vm2788, %vm2789
    %v2791 = vsel %vm2790, %v2782, %v2787
    %v2795 = vunpack.c.l.s4 269488144
    %v2796 = vunpack.c.0.s8 %v2795
    %v2797 = vperm.slane %v2781, %v2796
    %v2799 = vunpack.c.l.s4 842150450
    %v2800 = vunpack.c.0.s8 %v2799
    %v2801 = vperm.slane %v2781, %v2800
    %v2803 = vunpack.c.l.s4 1414812756
    %v2804 = vunpack.c.0.s8 %v2803
    %v2805 = vperm.slane %v2781, %v2804
    %v2807 = vunpack.c.l.s4 1987475062
    %v2808 = vunpack.c.0.s8 %v2807
    %v2809 = vperm.slane %v2781, %v2808
    %v2811 = vunpack.c.l.s4 269488144
    %v2812 = vunpack.c.0.s8 %v2811
    %v2813 = vperm.slane %v2791, %v2812
    %v2815 = vunpack.c.l.s4 842150450
    %v2816 = vunpack.c.0.s8 %v2815
    %v2817 = vperm.slane %v2791, %v2816
    %v2819 = vunpack.c.l.s4 1414812756
    %v2820 = vunpack.c.0.s8 %v2819
    %v2821 = vperm.slane %v2791, %v2820
    %v2823 = vunpack.c.l.s4 1987475062
    %v2824 = vunpack.c.0.s8 %v2823
    %v2825 = vperm.slane %v2791, %v2824
    %v2834 = vmul.f32 %v2719, %v2797
    %v2835 = vmul.f32 %v2720, %v2801
    %v2836 = vmul.f32 %v2721, %v2805
    %v2837 = vmul.f32 %v2722, %v2809
    %v2838 = vmul.f32 %v2723, %v2813
    %v2839 = vmul.f32 %v2724, %v2817
    %v2840 = vmul.f32 %v2725, %v2821
    %v2841 = vmul.f32 %v2726, %v2825
    %v2842 = vld [vmem:[%s10] sm:$0x1]
    %v2844 = vperm.slane %v2842, 0
    %v2846 = vrot.slane %v2844, 2
    %v2847 = vrot.slane %v2844, 4
    %v2848 = vrot.slane %v2844, 6
    %v2852 = vmul.f32 %v2834, %v2844
    %v2853 = vmul.f32 %v2835, %v2846
    %v2854 = vmul.f32 %v2836, %v2847
    %v2855 = vmul.f32 %v2837, %v2848
    %v2856 = vmul.f32 %v2838, %v2844
    %v2857 = vmul.f32 %v2839, %v2846
    %v2858 = vmul.f32 %v2840, %v2847
    %v2859 = vmul.f32 %v2841, %v2848
    %v2860 = vld [vmem:[%s11] sm:$0x1]
    %v2862 = vperm.slane %v2860, 0
    %v2864 = vrot.slane %v2862, 2
    %v2865 = vrot.slane %v2862, 4
    %v2866 = vrot.slane %v2862, 6
    %v2870 = vadd.f32 %v2852, %v2862
    %v2871 = vadd.f32 %v2853, %v2864
    %v2872 = vadd.f32 %v2854, %v2865
    %v2873 = vadd.f32 %v2855, %v2866
    %v2874 = vadd.f32 %v2856, %v2862
    %v2875 = vadd.f32 %v2857, %v2864
    %v2876 = vadd.f32 %v2858, %v2865
    %v2877 = vadd.f32 %v2859, %v2866
    %vm2878 = vcmask 254976
    %2879 = vst.msk [vmem:[#allocation14] sm:$0x3] %vm2878, %v2870
    %2880 = vst.msk [vmem:[#allocation14 + $0x2] sm:$0x3] %vm2878, %v2871
    %2881 = vst.msk [vmem:[#allocation14 + $0x4] sm:$0x3] %vm2878, %v2872
    %2882 = vst.msk [vmem:[#allocation14 + $0x6] sm:$0x3] %vm2878, %v2873
    %2883 = vst.msk [vmem:[#allocation14 + $0x8] sm:$0x3] %vm2878, %v2874
    %2884 = vst.msk [vmem:[#allocation14 + $0xa] sm:$0x3] %vm2878, %v2875
    %2885 = vst.msk [vmem:[#allocation14 + $0xc] sm:$0x3] %vm2878, %v2876
    %2886 = vst.msk [vmem:[#allocation14 + $0xe] sm:$0x3] %vm2878, %v2877
    // Predicated region
    $region78: #{tpu_custom_call.1} parent=1 // pred_check
      _
    $region79: #{tpu_custom_call.1} parent=1 // pred_check_branch
      %2888 = sbr.rel (0) target = $region81
    $region80: #{tpu_custom_call.1} parent=1 // pred_region
      %2890 = vsyncadd [#allocation4], 0
      %s2891 = sshll.u32 [#allocation14], 4
      %s2892 = int_to_ptr.vmem [resolvable:$true] %s2891
      %s2893 = sshll.u32 %s12, 4
      %s2894 = int_to_ptr.hbm [resolvable:$true] %s2893
      %2899 = dma.vmem_to_hbm [thread:$0]  %s2892, 256, %s2894, [#allocation4], 32, 32, 2
    $region81: #{tpu_custom_call.1} parent=1 // pred_fallthru
      _
    // Predicated region
    $region82: #{tpu_custom_call.1} parent=1 // pred_check
      _
    $region83: #{tpu_custom_call.1} parent=1 // pred_check_branch
      %2901 = sbr.rel (0) target = $region85
    $region84: #{tpu_custom_call.1} parent=1 // pred_region
      %2903 = dma.done [#allocation4], 256
    $region85: #{tpu_custom_call.1} parent=1 // pred_fallthru
      _
    %2904 = vsyncpa [#allocation3], 1
    %2905 = vsyncpa [#allocation6], 1
    %2906 = vsyncpa [#allocation9], 1
    %2907 = vsyncpa [#allocation12], 1
    %2908 = vsyncpa [#allocation4], 1

</llo_original>
